<compile_context>
chip_gen: v6e
topology: v6e:2x2x1
jax: 0.10.0
libtpu: 0.0.40
codegen_flags: <defaults>
</compile_context>

<pallas_src>
import functools

import jax
import jax.numpy as jnp
from jax import lax
from jax.experimental import pallas as pl
from jax.experimental.pallas import tpu as pltpu


# 3x3 taps in (dy, dx) order matching the (kh*3 + kw) tap-major weight repack.
_TAPS = tuple((dy, dx) for dy in (-1, 0, 1) for dx in (-1, 0, 1))


def _asf_kernel(inter, n_feat, C_f, H, W,
                fuse_ref, f0, f1, f2, f3,
                w1_ref, b1_ref, mask_ref, ws1_ref, ws2_ref, wc_ref, wcsum_ref,
                o_ref):
    HW = H * W
    # bf16 at the I/O boundary, f32 for all in-kernel math (v5e has no bf16 VPU/EUP).
    fuse = fuse_ref[0].astype(jnp.float32)                       # [C_in, HW]
    masks = mask_ref[...]                                        # [9, HW] precomputed

    def rolled(x, off):
        # y[..., p] == x[..., p + off] (cyclic); wrapped lanes are zeroed by masks.
        # NOTE: mask-multiply assumes finite inputs (0 * Inf = NaN otherwise); use
        # jnp.where(mask, ..., 0) if non-finite activations are possible.
        if off == 0:
            return x
        return pltpu.roll(x, shift=(-off) % HW, axis=1)

    # ---- self.conv: 3x3, C_in -> inter, padding=1, bias ----------------------------
    # One stacked-tap MXU matmul (M = 9*inter), then roll/mask/accumulate the nine
    # [inter, HW] slices.  W_t @ roll(x) == roll(W_t @ x): roll acts on lanes only.
    pre = jnp.dot(w1_ref[...], fuse, preferred_element_type=jnp.float32)  # [9*inter, HW]
    acc = jnp.zeros((inter, HW), jnp.float32)
    for t, (dy, dx) in enumerate(_TAPS):
        off = dy * W + dx
        acc = acc + masks[t:t + 1] * rolled(pre[t * inter:(t + 1) * inter], off)
    conv1 = acc + b1_ref[...]                                    # bias [inter, 1] bcast

    # ---- spatial attention: channel mean -> 3x3 conv -> ReLU -> 1x1 -> sigmoid -----
    sp = jnp.mean(conv1, axis=0, keepdims=True)                  # [1, HW]
    sacc = jnp.zeros((1, HW), jnp.float32)
    for t, (dy, dx) in enumerate(_TAPS):
        off = dy * W + dx
        sacc = sacc + ws1_ref[t] * (masks[t:t + 1] * rolled(sp, off))
    sacc = jnp.maximum(sacc, 0.0)                                # ReLU
    s_attn = jax.nn.sigmoid(sacc * ws2_ref[0])                   # 1x1 (no bias) + sigmoid

    # ---- channel attention: 1x1 conv inter -> n_feat (no bias) + sigmoid -----------
    # scores = s_attn + conv1 is folded in: wc @ (conv1 + 1*s) = wc@conv1 + rowsum(wc)*s
    c_attn = jax.nn.sigmoid(
        jnp.dot(wc_ref[...], conv1, preferred_element_type=jnp.float32)
        + wcsum_ref[...] * s_attn)                               # [n_feat, HW]

    # ---- scale each stage; build the fused slab in registers, one dense store ------
    pieces = [c_attn[i:i + 1, :] * f_ref[0].astype(jnp.float32)
              for i, f_ref in enumerate((f0, f1, f2, f3))]
    o_ref[0] = jnp.concatenate(pieces, axis=0).astype(o_ref.dtype)   # [n_feat*C_f, HW]


def asf_block_pallas(fuse_features, features_list, params, io_dtype=jnp.bfloat16):
    N, C_in, H, W = fuse_features.shape
    HW = H * W
    inter = params["conv_w"].shape[0]
    n_feat = len(features_list)
    assert n_feat == 4
    C_f = features_list[0].shape[1]

    # Lane-dense bf16 activations at the pallas_call boundary (contiguous reshape).
    fuse_flat = fuse_features.reshape(N, C_in, HW).astype(io_dtype)
    feats_flat = [f.reshape(N, C_f, HW).astype(io_dtype) for f in features_list]

    # Weight repacks (tiny, once, outside the kernel).
    # Stacked-tap conv weight: row block t*inter:(t+1)*inter is tap t's [inter, C_in].
    w1 = jnp.transpose(params["conv_w"], (2, 3, 0, 1)).reshape(9 * inter, C_in)
    w1 = w1.astype(jnp.float32)
    b1 = params["conv_b"].reshape(inter, 1).astype(jnp.float32)
    ws1 = params["spatial_w1"].reshape(9).astype(jnp.float32)    # [1,1,3,3] -> [9]
    ws2 = params["spatial_w2"].reshape(1).astype(jnp.float32)    # [1,1,1,1] -> [1]
    wc = params["channel_w"].reshape(n_feat, inter).astype(jnp.float32)
    wcsum = jnp.sum(wc, axis=1, keepdims=True)                   # rowsum for s_attn fold

    # Zero-padding validity masks for the 3x3 convs, precomputed once ([9, HW]).
    yy, xx = jnp.meshgrid(jnp.arange(H), jnp.arange(W), indexing="ij")
    masks = jnp.stack(
        [((yy + dy >= 0) & (yy + dy < H) & (xx + dx >= 0) & (xx + dx < W)).reshape(HW)
         for dy, dx in _TAPS]).astype(jnp.float32)

    kernel = functools.partial(_asf_kernel, inter, n_feat, C_f, H, W)

    in_specs = (
        [pl.BlockSpec((1, C_in, HW), lambda n: (n, 0, 0))]
        + [pl.BlockSpec((1, C_f, HW), lambda n: (n, 0, 0)) for _ in range(n_feat)]
        + [
            pl.BlockSpec((9 * inter, C_in), lambda n: (0, 0)),    # stacked-tap weights
            pl.BlockSpec((inter, 1), lambda n: (0, 0)),           # conv bias
            pl.BlockSpec((9, HW), lambda n: (0, 0)),              # boundary masks
            pl.BlockSpec(memory_space=pltpu.MemorySpace.SMEM),    # ws1 scalars
            pl.BlockSpec(memory_space=pltpu.MemorySpace.SMEM),    # ws2 scalar
            pl.BlockSpec((n_feat, inter), lambda n: (0, 0)),      # channel 1x1 weight
            pl.BlockSpec((n_feat, 1), lambda n: (0, 0)),          # rowsum(wc)
        ]
    )
    out_specs = pl.BlockSpec((1, n_feat * C_f, HW), lambda n: (n, 0, 0))
    out_shape = jax.ShapeDtypeStruct((N, n_feat * C_f, HW), io_dtype)

    io_bytes = jnp.dtype(io_dtype).itemsize
    flops = N * (2 * (9 * inter) * C_in * HW + 2 * n_feat * inter * HW)
    transcendentals = N * HW * (1 + n_feat)
    bytes_accessed = (io_bytes * N * HW * (C_in + 2 * n_feat * C_f)
                      + 4 * (9 * HW + 9 * inter * C_in + inter + 10
                             + n_feat * inter + n_feat))

    out = pl.pallas_call(
        kernel,
        out_shape=out_shape,
        grid_spec=pltpu.PrefetchScalarGridSpec(
            num_scalar_prefetch=0,
            grid=(N,),
            in_specs=in_specs,
            out_specs=out_specs,
        ),
        compiler_params=pltpu.CompilerParams(dimension_semantics=("parallel",)),
        cost_estimate=pl.CostEstimate(flops=flops, transcendentals=transcendentals,
                                      bytes_accessed=bytes_accessed),
    )(fuse_flat, *feats_flat, w1, b1, masks, ws1, ws2, wc, wcsum)

    # The channel concat was materialized inside the kernel; this reshape is free
    # (contiguous collapse of the lane-flattened spatial axis).
    return out.reshape(N, n_feat * C_f, H, W)


def asf_block_reference(fuse_features, features_list, params):
    """Pure-JAX reference mirroring the PyTorch module (NCHW)."""
    hi = lax.Precision.HIGHEST

    def conv(x, w, pad):
        dn = lax.conv_dimension_numbers(x.shape, w.shape, ("NCHW", "OIHW", "NCHW"))
        return lax.conv_general_dilated(x, w, (1, 1), ((pad, pad), (pad, pad)),
                                        dimension_numbers=dn, precision=hi)

    conv1 = conv(fuse_features, params["conv_w"], 1) + params["conv_b"][None, :, None, None]
    sp = jnp.mean(conv1, axis=1, keepdims=True)
    s = jax.nn.relu(conv(sp, params["spatial_w1"], 1))
    s = jax.nn.sigmoid(conv(s, params["spatial_w2"], 0))
    scores = s + conv1
    attn = jax.nn.sigmoid(conv(scores, params["channel_w"], 0))
    outs = [attn[:, i:i + 1] * features_list[i] for i in range(len(features_list))]
    return jnp.concatenate(outs, axis=1)


if __name__ == "__main__":
    # Small shapes consistent with ASFBlock(in_channels=16, inter_channels=4).
    N, C_in, H, W = 2, 16, 16, 16
    inter, n_feat = 4, 4
    C_f = C_in // n_feat  # each fused stage has in_channels // 4 channels

    key = jax.random.PRNGKey(0)
    ks = jax.random.split(key, 10)

    params = {
        "conv_w":     0.1 * jax.random.normal(ks[0], (inter, C_in, 3, 3), jnp.float32),
        "conv_b":     0.1 * jax.random.normal(ks[1], (inter,), jnp.float32),
        "spatial_w1": 0.1 * jax.random.normal(ks[2], (1, 1, 3, 3), jnp.float32),
        "spatial_w2": 0.1 * jax.random.normal(ks[3], (1, 1, 1, 1), jnp.float32),
        "channel_w":  0.1 * jax.random.normal(ks[4], (n_feat, inter, 1, 1), jnp.float32),
    }

    fuse_features = jax.random.normal(ks[5], (N, C_in, H, W), jnp.float32)
    features_list = [jax.random.normal(ks[6 + i], (N, C_f, H, W), jnp.float32)
                     for i in range(n_feat)]

    out = asf_block_pallas(fuse_features, features_list, params)
    out = jax.block_until_ready(out)

    # Reference with f32 math on the same bf16-quantized activations, so the
    # comparison isolates kernel error (MXU accum order + bf16 output store) from
    # the intended bf16 I/O quantization.
    fuse_q = fuse_features.astype(jnp.bfloat16).astype(jnp.float32)
    feats_q = [f.astype(jnp.bfloat16).astype(jnp.float32) for f in features_list]
    ref = jax.block_until_ready(asf_block_reference(fuse_q, feats_q, params))

    assert out.shape == (N, n_feat * C_f, H, W), out.shape
    out_f32 = out.astype(jnp.float32)
    max_err = float(jnp.max(jnp.abs(out_f32 - ref)))
    # bf16 output storage => ~0.4% relative quantization; the rest is MXU accum order.
    assert jnp.allclose(out_f32, ref, atol=2e-2, rtol=2e-2), max_err

    print("KERNEL_OK")
</pallas_src>

<mosaic_0001>
module attributes {stable_mosaic.version = 11 : i64} {
  func.func @_asf_kernel(%arg0: i32, %arg1: memref<1x16x256xbf16, #tpu.memory_space<vmem>>, %arg2: memref<1x4x256xbf16, #tpu.memory_space<vmem>>, %arg3: memref<1x4x256xbf16, #tpu.memory_space<vmem>>, %arg4: memref<1x4x256xbf16, #tpu.memory_space<vmem>>, %arg5: memref<1x4x256xbf16, #tpu.memory_space<vmem>>, %arg6: memref<36x16xf32, #tpu.memory_space<vmem>>, %arg7: memref<4x1xf32, #tpu.memory_space<vmem>>, %arg8: memref<9x256xf32, #tpu.memory_space<vmem>>, %arg9: memref<9xf32, #tpu.memory_space<smem>>, %arg10: memref<1xf32, #tpu.memory_space<smem>>, %arg11: memref<4x4xf32, #tpu.memory_space<vmem>>, %arg12: memref<4x1xf32, #tpu.memory_space<vmem>>, %arg13: memref<1x16x256xbf16, #tpu.memory_space<vmem>>) attributes {dimension_semantics = [#tpu.dimension_semantics<parallel>], iteration_bounds = array<i64: 2>, scalar_prefetch = 0 : i64, scratch_operands = 0 : i64, tpu.core_type = #tpu.core_type<tc>, window_params = [{transform_indices = @transform_0, window_bounds = array<i64: 1, 16, 256>}, {transform_indices = @transform_1, window_bounds = array<i64: 1, 4, 256>}, {transform_indices = @transform_2, window_bounds = array<i64: 1, 4, 256>}, {transform_indices = @transform_3, window_bounds = array<i64: 1, 4, 256>}, {transform_indices = @transform_4, window_bounds = array<i64: 1, 4, 256>}, {pipeline_mode = #tpu.pipeline_mode<synchronous>, transform_indices = @transform_5, window_bounds = array<i64: 36, 16>}, {pipeline_mode = #tpu.pipeline_mode<synchronous>, transform_indices = @transform_6, window_bounds = array<i64: 4, 1>}, {pipeline_mode = #tpu.pipeline_mode<synchronous>, transform_indices = @transform_7, window_bounds = array<i64: 9, 256>}, {transform_indices = @transform_8, window_bounds = array<i64: 9>}, {transform_indices = @transform_9, window_bounds = array<i64: 1>}, {pipeline_mode = #tpu.pipeline_mode<synchronous>, transform_indices = @transform_10, window_bounds = array<i64: 4, 4>}, {pipeline_mode = #tpu.pipeline_mode<synchronous>, transform_indices = @transform_11, window_bounds = array<i64: 4, 1>}, {transform_indices = @transform_12, window_bounds = array<i64: 1, 16, 256>}]} {
    %c0 = arith.constant 0 : index
    %c0_0 = arith.constant 0 : index
    %c0_1 = arith.constant 0 : index
    %0 = vector.load %arg1[%c0, %c0_0, %c0_1] : memref<1x16x256xbf16, #tpu.memory_space<vmem>>, vector<1x16x256xbf16>
    %1 = vector.shape_cast %0 : vector<1x16x256xbf16> to vector<16x256xbf16>
    %2 = arith.extf %1 : vector<16x256xbf16> to vector<16x256xf32>
    %c0_2 = arith.constant 0 : index
    %c0_3 = arith.constant 0 : index
    %3 = vector.load %arg8[%c0_2, %c0_3] : memref<9x256xf32, #tpu.memory_space<vmem>>, vector<9x256xf32>
    %c0_4 = arith.constant 0 : index
    %c0_5 = arith.constant 0 : index
    %4 = vector.load %arg6[%c0_4, %c0_5] : memref<36x16xf32, #tpu.memory_space<vmem>>, vector<36x16xf32>
    %cst = arith.constant dense<0.000000e+00> : vector<36x256xf32>
    %5 = tpu.matmul %4, %2, %cst {dimension_numbers = #tpu.dot_dimension_numbers<[1], [0], [0], [1], [0, 0, 1, 1], [], []>} : vector<36x16xf32>, vector<16x256xf32>, vector<36x256xf32> -> vector<36x256xf32>
    %cst_6 = arith.constant 0.000000e+00 : f32
    %6 = vector.broadcast %cst_6 : f32 to vector<4x256xf32>
    %7 = vector.extract_strided_slice %3 {offsets = [0, 0], sizes = [1, 256], strides = [1, 1]} : vector<9x256xf32> to vector<1x256xf32>
    %8 = vector.extract_strided_slice %5 {offsets = [0, 0], sizes = [4, 256], strides = [1, 1]} : vector<36x256xf32> to vector<4x256xf32>
    %c17_i32 = arith.constant 17 : i32
    %9 = tpu.dynamic_rotate %8 by %c17_i32 dim 1 : vector<4x256xf32>, i32 -> vector<4x256xf32>
    %10 = vector.broadcast %7 : vector<1x256xf32> to vector<4x256xf32>
    %11 = arith.mulf %10, %9 : vector<4x256xf32>
    %12 = arith.addf %6, %11 : vector<4x256xf32>
    %13 = vector.extract_strided_slice %3 {offsets = [1, 0], sizes = [1, 256], strides = [1, 1]} : vector<9x256xf32> to vector<1x256xf32>
    %14 = vector.extract_strided_slice %5 {offsets = [4, 0], sizes = [4, 256], strides = [1, 1]} : vector<36x256xf32> to vector<4x256xf32>
    %c16_i32 = arith.constant 16 : i32
    %15 = tpu.dynamic_rotate %14 by %c16_i32 dim 1 : vector<4x256xf32>, i32 -> vector<4x256xf32>
    %16 = vector.broadcast %13 : vector<1x256xf32> to vector<4x256xf32>
    %17 = arith.mulf %16, %15 : vector<4x256xf32>
    %18 = arith.addf %12, %17 : vector<4x256xf32>
    %19 = vector.extract_strided_slice %3 {offsets = [2, 0], sizes = [1, 256], strides = [1, 1]} : vector<9x256xf32> to vector<1x256xf32>
    %20 = vector.extract_strided_slice %5 {offsets = [8, 0], sizes = [4, 256], strides = [1, 1]} : vector<36x256xf32> to vector<4x256xf32>
    %c15_i32 = arith.constant 15 : i32
    %21 = tpu.dynamic_rotate %20 by %c15_i32 dim 1 : vector<4x256xf32>, i32 -> vector<4x256xf32>
    %22 = vector.broadcast %19 : vector<1x256xf32> to vector<4x256xf32>
    %23 = arith.mulf %22, %21 : vector<4x256xf32>
    %24 = arith.addf %18, %23 : vector<4x256xf32>
    %25 = vector.extract_strided_slice %3 {offsets = [3, 0], sizes = [1, 256], strides = [1, 1]} : vector<9x256xf32> to vector<1x256xf32>
    %26 = vector.extract_strided_slice %5 {offsets = [12, 0], sizes = [4, 256], strides = [1, 1]} : vector<36x256xf32> to vector<4x256xf32>
    %c1_i32 = arith.constant 1 : i32
    %27 = tpu.dynamic_rotate %26 by %c1_i32 dim 1 : vector<4x256xf32>, i32 -> vector<4x256xf32>
    %28 = vector.broadcast %25 : vector<1x256xf32> to vector<4x256xf32>
    %29 = arith.mulf %28, %27 : vector<4x256xf32>
    %30 = arith.addf %24, %29 : vector<4x256xf32>
    %31 = vector.extract_strided_slice %3 {offsets = [4, 0], sizes = [1, 256], strides = [1, 1]} : vector<9x256xf32> to vector<1x256xf32>
    %32 = vector.extract_strided_slice %5 {offsets = [16, 0], sizes = [4, 256], strides = [1, 1]} : vector<36x256xf32> to vector<4x256xf32>
    %33 = vector.broadcast %31 : vector<1x256xf32> to vector<4x256xf32>
    %34 = arith.mulf %33, %32 : vector<4x256xf32>
    %35 = arith.addf %30, %34 : vector<4x256xf32>
    %36 = vector.extract_strided_slice %3 {offsets = [5, 0], sizes = [1, 256], strides = [1, 1]} : vector<9x256xf32> to vector<1x256xf32>
    %37 = vector.extract_strided_slice %5 {offsets = [20, 0], sizes = [4, 256], strides = [1, 1]} : vector<36x256xf32> to vector<4x256xf32>
    %c255_i32 = arith.constant 255 : i32
    %38 = tpu.dynamic_rotate %37 by %c255_i32 dim 1 : vector<4x256xf32>, i32 -> vector<4x256xf32>
    %39 = vector.broadcast %36 : vector<1x256xf32> to vector<4x256xf32>
    %40 = arith.mulf %39, %38 : vector<4x256xf32>
    %41 = arith.addf %35, %40 : vector<4x256xf32>
    %42 = vector.extract_strided_slice %3 {offsets = [6, 0], sizes = [1, 256], strides = [1, 1]} : vector<9x256xf32> to vector<1x256xf32>
    %43 = vector.extract_strided_slice %5 {offsets = [24, 0], sizes = [4, 256], strides = [1, 1]} : vector<36x256xf32> to vector<4x256xf32>
    %c241_i32 = arith.constant 241 : i32
    %44 = tpu.dynamic_rotate %43 by %c241_i32 dim 1 : vector<4x256xf32>, i32 -> vector<4x256xf32>
    %45 = vector.broadcast %42 : vector<1x256xf32> to vector<4x256xf32>
    %46 = arith.mulf %45, %44 : vector<4x256xf32>
    %47 = arith.addf %41, %46 : vector<4x256xf32>
    %48 = vector.extract_strided_slice %3 {offsets = [7, 0], sizes = [1, 256], strides = [1, 1]} : vector<9x256xf32> to vector<1x256xf32>
    %49 = vector.extract_strided_slice %5 {offsets = [28, 0], sizes = [4, 256], strides = [1, 1]} : vector<36x256xf32> to vector<4x256xf32>
    %c240_i32 = arith.constant 240 : i32
    %50 = tpu.dynamic_rotate %49 by %c240_i32 dim 1 : vector<4x256xf32>, i32 -> vector<4x256xf32>
    %51 = vector.broadcast %48 : vector<1x256xf32> to vector<4x256xf32>
    %52 = arith.mulf %51, %50 : vector<4x256xf32>
    %53 = arith.addf %47, %52 : vector<4x256xf32>
    %54 = vector.extract_strided_slice %3 {offsets = [8, 0], sizes = [1, 256], strides = [1, 1]} : vector<9x256xf32> to vector<1x256xf32>
    %55 = vector.extract_strided_slice %5 {offsets = [32, 0], sizes = [4, 256], strides = [1, 1]} : vector<36x256xf32> to vector<4x256xf32>
    %c239_i32 = arith.constant 239 : i32
    %56 = tpu.dynamic_rotate %55 by %c239_i32 dim 1 : vector<4x256xf32>, i32 -> vector<4x256xf32>
    %57 = vector.broadcast %54 : vector<1x256xf32> to vector<4x256xf32>
    %58 = arith.mulf %57, %56 : vector<4x256xf32>
    %59 = arith.addf %53, %58 : vector<4x256xf32>
    %c0_7 = arith.constant 0 : index
    %c0_8 = arith.constant 0 : index
    %60 = vector.load %arg7[%c0_7, %c0_8] : memref<4x1xf32, #tpu.memory_space<vmem>>, vector<4x1xf32>
    %61 = vector.broadcast %60 : vector<4x1xf32> to vector<4x256xf32>
    %62 = arith.addf %59, %61 : vector<4x256xf32>
    %cst_9 = arith.constant dense<0.000000e+00> : vector<256xf32>
    %63 = vector.multi_reduction <add>, %62, %cst_9 [0] : vector<4x256xf32> to vector<256xf32>
    %64 = vector.shape_cast %63 : vector<256xf32> to vector<1x256xf32>
    %cst_10 = arith.constant 4.000000e+00 : f32
    %65 = vector.broadcast %cst_10 : f32 to vector<1x256xf32>
    %66 = arith.divf %64, %65 : vector<1x256xf32>
    %cst_11 = arith.constant 0.000000e+00 : f32
    %67 = vector.broadcast %cst_11 : f32 to vector<1x256xf32>
    %c0_12 = arith.constant 0 : index
    %68 = memref.load %arg9[%c0_12] : memref<9xf32, #tpu.memory_space<smem>>
    %69 = vector.extract_strided_slice %3 {offsets = [0, 0], sizes = [1, 256], strides = [1, 1]} : vector<9x256xf32> to vector<1x256xf32>
    %c17_i32_13 = arith.constant 17 : i32
    %70 = tpu.dynamic_rotate %66 by %c17_i32_13 dim 1 : vector<1x256xf32>, i32 -> vector<1x256xf32>
    %71 = arith.mulf %69, %70 : vector<1x256xf32>
    %72 = vector.broadcast %68 : f32 to vector<1x256xf32>
    %73 = arith.mulf %72, %71 : vector<1x256xf32>
    %74 = arith.addf %67, %73 : vector<1x256xf32>
    %c1 = arith.constant 1 : index
    %75 = memref.load %arg9[%c1] : memref<9xf32, #tpu.memory_space<smem>>
    %76 = vector.extract_strided_slice %3 {offsets = [1, 0], sizes = [1, 256], strides = [1, 1]} : vector<9x256xf32> to vector<1x256xf32>
    %c16_i32_14 = arith.constant 16 : i32
    %77 = tpu.dynamic_rotate %66 by %c16_i32_14 dim 1 : vector<1x256xf32>, i32 -> vector<1x256xf32>
    %78 = arith.mulf %76, %77 : vector<1x256xf32>
    %79 = vector.broadcast %75 : f32 to vector<1x256xf32>
    %80 = arith.mulf %79, %78 : vector<1x256xf32>
    %81 = arith.addf %74, %80 : vector<1x256xf32>
    %c2 = arith.constant 2 : index
    %82 = memref.load %arg9[%c2] : memref<9xf32, #tpu.memory_space<smem>>
    %83 = vector.extract_strided_slice %3 {offsets = [2, 0], sizes = [1, 256], strides = [1, 1]} : vector<9x256xf32> to vector<1x256xf32>
    %c15_i32_15 = arith.constant 15 : i32
    %84 = tpu.dynamic_rotate %66 by %c15_i32_15 dim 1 : vector<1x256xf32>, i32 -> vector<1x256xf32>
    %85 = arith.mulf %83, %84 : vector<1x256xf32>
    %86 = vector.broadcast %82 : f32 to vector<1x256xf32>
    %87 = arith.mulf %86, %85 : vector<1x256xf32>
    %88 = arith.addf %81, %87 : vector<1x256xf32>
    %c3 = arith.constant 3 : index
    %89 = memref.load %arg9[%c3] : memref<9xf32, #tpu.memory_space<smem>>
    %90 = vector.extract_strided_slice %3 {offsets = [3, 0], sizes = [1, 256], strides = [1, 1]} : vector<9x256xf32> to vector<1x256xf32>
    %c1_i32_16 = arith.constant 1 : i32
    %91 = tpu.dynamic_rotate %66 by %c1_i32_16 dim 1 : vector<1x256xf32>, i32 -> vector<1x256xf32>
    %92 = arith.mulf %90, %91 : vector<1x256xf32>
    %93 = vector.broadcast %89 : f32 to vector<1x256xf32>
    %94 = arith.mulf %93, %92 : vector<1x256xf32>
    %95 = arith.addf %88, %94 : vector<1x256xf32>
    %c4 = arith.constant 4 : index
    %96 = memref.load %arg9[%c4] : memref<9xf32, #tpu.memory_space<smem>>
    %97 = vector.extract_strided_slice %3 {offsets = [4, 0], sizes = [1, 256], strides = [1, 1]} : vector<9x256xf32> to vector<1x256xf32>
    %98 = arith.mulf %97, %66 : vector<1x256xf32>
    %99 = vector.broadcast %96 : f32 to vector<1x256xf32>
    %100 = arith.mulf %99, %98 : vector<1x256xf32>
    %101 = arith.addf %95, %100 : vector<1x256xf32>
    %c5 = arith.constant 5 : index
    %102 = memref.load %arg9[%c5] : memref<9xf32, #tpu.memory_space<smem>>
    %103 = vector.extract_strided_slice %3 {offsets = [5, 0], sizes = [1, 256], strides = [1, 1]} : vector<9x256xf32> to vector<1x256xf32>
    %c255_i32_17 = arith.constant 255 : i32
    %104 = tpu.dynamic_rotate %66 by %c255_i32_17 dim 1 : vector<1x256xf32>, i32 -> vector<1x256xf32>
    %105 = arith.mulf %103, %104 : vector<1x256xf32>
    %106 = vector.broadcast %102 : f32 to vector<1x256xf32>
    %107 = arith.mulf %106, %105 : vector<1x256xf32>
    %108 = arith.addf %101, %107 : vector<1x256xf32>
    %c6 = arith.constant 6 : index
    %109 = memref.load %arg9[%c6] : memref<9xf32, #tpu.memory_space<smem>>
    %110 = vector.extract_strided_slice %3 {offsets = [6, 0], sizes = [1, 256], strides = [1, 1]} : vector<9x256xf32> to vector<1x256xf32>
    %c241_i32_18 = arith.constant 241 : i32
    %111 = tpu.dynamic_rotate %66 by %c241_i32_18 dim 1 : vector<1x256xf32>, i32 -> vector<1x256xf32>
    %112 = arith.mulf %110, %111 : vector<1x256xf32>
    %113 = vector.broadcast %109 : f32 to vector<1x256xf32>
    %114 = arith.mulf %113, %112 : vector<1x256xf32>
    %115 = arith.addf %108, %114 : vector<1x256xf32>
    %c7 = arith.constant 7 : index
    %116 = memref.load %arg9[%c7] : memref<9xf32, #tpu.memory_space<smem>>
    %117 = vector.extract_strided_slice %3 {offsets = [7, 0], sizes = [1, 256], strides = [1, 1]} : vector<9x256xf32> to vector<1x256xf32>
    %c240_i32_19 = arith.constant 240 : i32
    %118 = tpu.dynamic_rotate %66 by %c240_i32_19 dim 1 : vector<1x256xf32>, i32 -> vector<1x256xf32>
    %119 = arith.mulf %117, %118 : vector<1x256xf32>
    %120 = vector.broadcast %116 : f32 to vector<1x256xf32>
    %121 = arith.mulf %120, %119 : vector<1x256xf32>
    %122 = arith.addf %115, %121 : vector<1x256xf32>
    %c8 = arith.constant 8 : index
    %123 = memref.load %arg9[%c8] : memref<9xf32, #tpu.memory_space<smem>>
    %124 = vector.extract_strided_slice %3 {offsets = [8, 0], sizes = [1, 256], strides = [1, 1]} : vector<9x256xf32> to vector<1x256xf32>
    %c239_i32_20 = arith.constant 239 : i32
    %125 = tpu.dynamic_rotate %66 by %c239_i32_20 dim 1 : vector<1x256xf32>, i32 -> vector<1x256xf32>
    %126 = arith.mulf %124, %125 : vector<1x256xf32>
    %127 = vector.broadcast %123 : f32 to vector<1x256xf32>
    %128 = arith.mulf %127, %126 : vector<1x256xf32>
    %129 = arith.addf %122, %128 : vector<1x256xf32>
    %cst_21 = arith.constant 0.000000e+00 : f32
    %130 = vector.broadcast %cst_21 : f32 to vector<1x256xf32>
    %131 = arith.maximumf %129, %130 : vector<1x256xf32>
    %c0_22 = arith.constant 0 : index
    %132 = memref.load %arg10[%c0_22] : memref<1xf32, #tpu.memory_space<smem>>
    %133 = vector.broadcast %132 : f32 to vector<1x256xf32>
    %134 = arith.mulf %131, %133 : vector<1x256xf32>
    %135 = arith.negf %134 : vector<1x256xf32>
    %136 = math.exp %135 : vector<1x256xf32>
    %cst_23 = arith.constant 1.000000e+00 : f32
    %137 = vector.broadcast %cst_23 : f32 to vector<1x256xf32>
    %138 = arith.addf %137, %136 : vector<1x256xf32>
    %139 = arith.divf %137, %138 : vector<1x256xf32>
    %c0_24 = arith.constant 0 : index
    %c0_25 = arith.constant 0 : index
    %140 = vector.load %arg11[%c0_24, %c0_25] : memref<4x4xf32, #tpu.memory_space<vmem>>, vector<4x4xf32>
    %cst_26 = arith.constant dense<0.000000e+00> : vector<4x256xf32>
    %141 = tpu.matmul %140, %62, %cst_26 {dimension_numbers = #tpu.dot_dimension_numbers<[1], [0], [0], [1], [0, 0, 1, 1], [], []>} : vector<4x4xf32>, vector<4x256xf32>, vector<4x256xf32> -> vector<4x256xf32>
    %c0_27 = arith.constant 0 : index
    %c0_28 = arith.constant 0 : index
    %142 = vector.load %arg12[%c0_27, %c0_28] : memref<4x1xf32, #tpu.memory_space<vmem>>, vector<4x1xf32>
    %143 = vector.broadcast %142 : vector<4x1xf32> to vector<4x256xf32>
    %144 = vector.broadcast %139 : vector<1x256xf32> to vector<4x256xf32>
    %145 = arith.mulf %143, %144 : vector<4x256xf32>
    %146 = arith.addf %141, %145 : vector<4x256xf32>
    %147 = arith.negf %146 : vector<4x256xf32>
    %148 = math.exp %147 : vector<4x256xf32>
    %cst_29 = arith.constant 1.000000e+00 : f32
    %149 = vector.broadcast %cst_29 : f32 to vector<4x256xf32>
    %150 = arith.addf %149, %148 : vector<4x256xf32>
    %151 = arith.divf %149, %150 : vector<4x256xf32>
    %152 = vector.extract_strided_slice %151 {offsets = [0, 0], sizes = [1, 256], strides = [1, 1]} : vector<4x256xf32> to vector<1x256xf32>
    %c0_30 = arith.constant 0 : index
    %c0_31 = arith.constant 0 : index
    %c0_32 = arith.constant 0 : index
    %153 = vector.load %arg2[%c0_30, %c0_31, %c0_32] : memref<1x4x256xbf16, #tpu.memory_space<vmem>>, vector<1x4x256xbf16>
    %154 = vector.shape_cast %153 : vector<1x4x256xbf16> to vector<4x256xbf16>
    %155 = arith.extf %154 : vector<4x256xbf16> to vector<4x256xf32>
    %156 = vector.broadcast %152 : vector<1x256xf32> to vector<4x256xf32>
    %157 = arith.mulf %156, %155 : vector<4x256xf32>
    %158 = vector.extract_strided_slice %151 {offsets = [1, 0], sizes = [1, 256], strides = [1, 1]} : vector<4x256xf32> to vector<1x256xf32>
    %c0_33 = arith.constant 0 : index
    %c0_34 = arith.constant 0 : index
    %c0_35 = arith.constant 0 : index
    %159 = vector.load %arg3[%c0_33, %c0_34, %c0_35] : memref<1x4x256xbf16, #tpu.memory_space<vmem>>, vector<1x4x256xbf16>
    %160 = vector.shape_cast %159 : vector<1x4x256xbf16> to vector<4x256xbf16>
    %161 = arith.extf %160 : vector<4x256xbf16> to vector<4x256xf32>
    %162 = vector.broadcast %158 : vector<1x256xf32> to vector<4x256xf32>
    %163 = arith.mulf %162, %161 : vector<4x256xf32>
    %164 = vector.extract_strided_slice %151 {offsets = [2, 0], sizes = [1, 256], strides = [1, 1]} : vector<4x256xf32> to vector<1x256xf32>
    %c0_36 = arith.constant 0 : index
    %c0_37 = arith.constant 0 : index
    %c0_38 = arith.constant 0 : index
    %165 = vector.load %arg4[%c0_36, %c0_37, %c0_38] : memref<1x4x256xbf16, #tpu.memory_space<vmem>>, vector<1x4x256xbf16>
    %166 = vector.shape_cast %165 : vector<1x4x256xbf16> to vector<4x256xbf16>
    %167 = arith.extf %166 : vector<4x256xbf16> to vector<4x256xf32>
    %168 = vector.broadcast %164 : vector<1x256xf32> to vector<4x256xf32>
    %169 = arith.mulf %168, %167 : vector<4x256xf32>
    %170 = vector.extract_strided_slice %151 {offsets = [3, 0], sizes = [1, 256], strides = [1, 1]} : vector<4x256xf32> to vector<1x256xf32>
    %c0_39 = arith.constant 0 : index
    %c0_40 = arith.constant 0 : index
    %c0_41 = arith.constant 0 : index
    %171 = vector.load %arg5[%c0_39, %c0_40, %c0_41] : memref<1x4x256xbf16, #tpu.memory_space<vmem>>, vector<1x4x256xbf16>
    %172 = vector.shape_cast %171 : vector<1x4x256xbf16> to vector<4x256xbf16>
    %173 = arith.extf %172 : vector<4x256xbf16> to vector<4x256xf32>
    %174 = vector.broadcast %170 : vector<1x256xf32> to vector<4x256xf32>
    %175 = arith.mulf %174, %173 : vector<4x256xf32>
    %176 = tpu.concatenate %157, %163, %169, %175 in 0 : vector<4x256xf32>, vector<4x256xf32>, vector<4x256xf32>, vector<4x256xf32> -> vector<16x256xf32>
    %177 = arith.truncf %176 : vector<16x256xf32> to vector<16x256xbf16>
    %c0_42 = arith.constant 0 : index
    %c0_43 = arith.constant 0 : index
    %c0_44 = arith.constant 0 : index
    %178 = vector.load %arg13[%c0_42, %c0_43, %c0_44] : memref<1x16x256xbf16, #tpu.memory_space<vmem>>, vector<1x16x256xbf16>
    %179 = vector.shape_cast %178 : vector<1x16x256xbf16> to vector<16x256xbf16>
    %180 = vector.shape_cast %177 : vector<16x256xbf16> to vector<1x16x256xbf16>
    tpu.vector_store %arg13[%c0_42, %c0_43, %c0_44], %180 {strides = array<i32>} : memref<1x16x256xbf16, #tpu.memory_space<vmem>>, vector<1x16x256xbf16>,
    return
  }
  func.func @transform_0(%arg0: i32) -> (i32, i32, i32) {
    %c0_i32 = arith.constant 0 : i32
    %c0_i32_0 = arith.constant 0 : i32
    %c0_i32_1 = arith.constant 0 : i32
    return %arg0, %c0_i32, %c0_i32_0 : i32, i32, i32
  }
  func.func @transform_1(%arg0: i32) -> (i32, i32, i32) {
    %c0_i32 = arith.constant 0 : i32
    %c0_i32_0 = arith.constant 0 : i32
    %c0_i32_1 = arith.constant 0 : i32
    return %arg0, %c0_i32, %c0_i32_0 : i32, i32, i32
  }
  func.func @transform_2(%arg0: i32) -> (i32, i32, i32) {
    %c0_i32 = arith.constant 0 : i32
    %c0_i32_0 = arith.constant 0 : i32
    %c0_i32_1 = arith.constant 0 : i32
    return %arg0, %c0_i32, %c0_i32_0 : i32, i32, i32
  }
  func.func @transform_3(%arg0: i32) -> (i32, i32, i32) {
    %c0_i32 = arith.constant 0 : i32
    %c0_i32_0 = arith.constant 0 : i32
    %c0_i32_1 = arith.constant 0 : i32
    return %arg0, %c0_i32, %c0_i32_0 : i32, i32, i32
  }
  func.func @transform_4(%arg0: i32) -> (i32, i32, i32) {
    %c0_i32 = arith.constant 0 : i32
    %c0_i32_0 = arith.constant 0 : i32
    %c0_i32_1 = arith.constant 0 : i32
    return %arg0, %c0_i32, %c0_i32_0 : i32, i32, i32
  }
  func.func @transform_5(%arg0: i32) -> (i32, i32) {
    %c0_i32 = arith.constant 0 : i32
    %c0_i32_0 = arith.constant 0 : i32
    %c0_i32_1 = arith.constant 0 : i32
    return %c0_i32, %c0_i32_0 : i32, i32
  }
  func.func @transform_6(%arg0: i32) -> (i32, i32) {
    %c0_i32 = arith.constant 0 : i32
    %c0_i32_0 = arith.constant 0 : i32
    %c0_i32_1 = arith.constant 0 : i32
    return %c0_i32, %c0_i32_0 : i32, i32
  }
  func.func @transform_7(%arg0: i32) -> (i32, i32) {
    %c0_i32 = arith.constant 0 : i32
    %c0_i32_0 = arith.constant 0 : i32
    %c0_i32_1 = arith.constant 0 : i32
    return %c0_i32, %c0_i32_0 : i32, i32
  }
  func.func @transform_8(%arg0: i32) -> i32 {
    %c0_i32 = arith.constant 0 : i32
    %c0_i32_0 = arith.constant 0 : i32
    return %c0_i32 : i32
  }
  func.func @transform_9(%arg0: i32) -> i32 {
    %c0_i32 = arith.constant 0 : i32
    %c0_i32_0 = arith.constant 0 : i32
    return %c0_i32 : i32
  }
  func.func @transform_10(%arg0: i32) -> (i32, i32) {
    %c0_i32 = arith.constant 0 : i32
    %c0_i32_0 = arith.constant 0 : i32
    %c0_i32_1 = arith.constant 0 : i32
    return %c0_i32, %c0_i32_0 : i32, i32
  }
  func.func @transform_11(%arg0: i32) -> (i32, i32) {
    %c0_i32 = arith.constant 0 : i32
    %c0_i32_0 = arith.constant 0 : i32
    %c0_i32_1 = arith.constant 0 : i32
    return %c0_i32, %c0_i32_0 : i32, i32
  }
  func.func @transform_12(%arg0: i32) -> (i32, i32, i32) {
    %c0_i32 = arith.constant 0 : i32
    %c0_i32_0 = arith.constant 0 : i32
    %c0_i32_1 = arith.constant 0 : i32
    return %arg0, %c0_i32, %c0_i32_0 : i32, i32, i32
  }
}

</mosaic_0001>

<llo_original>
// kernel: tpu_custom_call.1
$region0: #{tpu_custom_call.1}
  #allocation0 [shape = 'u32[]', space=smem, size = 0x4, offset = 0x4, fixed_abs, tag = 'smem constant byte address 0x4 - core index']
  #allocation1 [shape = 'u32[144,128]{1,0:T(1,128)}', space=vmem, size = 0x12000, scoped, tag = 'internal scratch']
  #allocation2 [shape = 'f32[1]{0:T(128)S(6)}', space=smem, size = 0x200, scoped, tag = 'scoped memory for tpu_custom_call.1']
  %s0 = inlined_call_operand.vmem [shape: bf16[2,16,256], index: 0, kind: input, shape index: {}]
  %s1 = inlined_call_operand.hbm [shape: bf16[2,4,256], index: 1, kind: input, shape index: {}]
  %s2 = inlined_call_operand.hbm [shape: bf16[2,4,256], index: 2, kind: input, shape index: {}]
  %s3 = inlined_call_operand.vmem [shape: bf16[2,4,256], index: 3, kind: input, shape index: {}]
  %s4 = inlined_call_operand.hbm [shape: bf16[2,4,256], index: 4, kind: input, shape index: {}]
  %s5 = inlined_call_operand.vmem [shape: f32[36,16], index: 5, kind: input, shape index: {}]
  %s6 = inlined_call_operand.vmem [shape: f32[4,1], index: 6, kind: input, shape index: {}]
  %s7 = inlined_call_operand.vmem [shape: f32[9,256], index: 7, kind: input, shape index: {}]
  %s8 = inlined_call_operand.vmem [shape: f32[9], index: 8, kind: input, shape index: {}]
  %s9 = inlined_call_operand.<no memory space> [shape: f32[1], index: 9, kind: input, shape index: {}]
  %s10 = inlined_call_operand.vmem [shape: f32[4,4], index: 10, kind: input, shape index: {}]
  %s11 = inlined_call_operand.vmem [shape: f32[4,1], index: 11, kind: input, shape index: {}]
  %s12 = inlined_call_operand.hbm [shape: bf16[2,16,256], index: 12, kind: output, shape index: {}]
  %s13 = sld [smem:[#allocation0]]
  $region97: #{tpu_custom_call.1} parent=0
    _
  %s15 = ssub.s32 1, %s13
  %s16 = scalar_select 0, %s15, %s13
  %17 = sst [smem:[#allocation2]] %s9
  $region1: #{tpu_custom_call.1} parent=0
    #allocation3 [shape = 'u8[4096]{0}', space=vmem, size = 0x1000, scoped, tag = 'input window, operand 1']
    #allocation4 [shape = 's32[2]{0}', space=sflag, size = 0x8, scoped, tag = 'scoped memory for tpu_custom_call.1']
    #allocation5 [shape = 's32[2]{0}', space=sflag, size = 0x8, scoped, tag = 'scoped memory for tpu_custom_call.1']
    #allocation6 [shape = 's32[2]{0}', space=sflag, size = 0x8, scoped, tag = 'scoped memory for tpu_custom_call.1']
    #allocation7 [shape = 'u8[4096]{0}', space=vmem, size = 0x1000, scoped, tag = 'input window, operand 2']
    #allocation8 [shape = 's32[2]{0}', space=sflag, size = 0x8, scoped, tag = 'scoped memory for tpu_custom_call.1']
    #allocation9 [shape = 'u8[4096]{0}', space=vmem, size = 0x1000, scoped, tag = 'input window, operand 4']
    #allocation10 [shape = 'u8[512]{0}', space=smem, size = 0x200, scoped, tag = 'input window, operand 8, single buffered']
    #allocation11 [shape = 'u8[16384]{0}', space=vmem, size = 0x4000, scoped, tag = 'output window, operand 0']
    %18 = vsyncpa [#allocation4], 0
    %s19 = scalar_lea.sflag [#allocation4], 1
    %20 = vsyncpa %s19, 0
    %21 = vsyncpa [#allocation8], 0
    %s22 = scalar_lea.sflag [#allocation8], 1
    %23 = vsyncpa %s22, 0
    %24 = vsyncpa [#allocation6], 0
    %25 = vsyncpa [#allocation5], 0
    %s26 = scalar_lea.sflag [#allocation5], 1
    %27 = vsyncpa %s26, 0
    loop: start=0, step=1, limit=4
    $region2: #{tpu_custom_call.1} parent=1 // loop_pre_header
      _
    $region3: #{tpu_custom_call.1} parent=1 // loop_header
      %s29 = sphi 0, %s33
      %p30 = scmp.ge.s32.totalorder %s29, 4
      %s39 = sphi 0, %s41
      %s42 = sphi 0, %s39
      %s43 = sphi 0, %s42
      %s59 = sphi 0, %s43
      %s65 = sphi 0, %s67
      %s68 = sphi 0, %s65
      %s69 = sphi 0, %s68
      %s85 = sphi 0, %s69
      %s91 = sphi 0, %s93
      %s94 = sphi 0, %s91
      %s95 = sphi 0, %s94
      %s111 = sphi 0, %s95
      %s117 = sphi 0, %s119
      %s120 = sphi 0, %s117
      %s121 = sphi 0, %s120
      %s137 = sphi 0, %s121
      %s143 = sphi 0, %s145
      %s146 = sphi 0, %s143
      %s147 = sphi 0, %s146
      %s163 = sphi 0, %s147
      %s167 = sphi 0, %s167
      %s169 = sphi 0, %s167
      %s170 = sphi 0, %s169
      %s184 = sphi 0, %s170
      %s188 = sphi 0, %s188
      %s190 = sphi 0, %s188
      %s191 = sphi 0, %s190
      %s205 = sphi 0, %s191
      %s209 = sphi 0, %s209
      %s211 = sphi 0, %s209
      %s212 = sphi 0, %s211
      %s226 = sphi 0, %s212
      %s230 = sphi 0, %s230
      %s232 = sphi 0, %s230
      %s233 = sphi 0, %s232
      %s247 = sphi 0, %s233
      %s251 = sphi 0, %s251
      %s253 = sphi 0, %s251
      %s254 = sphi 0, %s253
      %s268 = sphi 0, %s254
      %s272 = sphi 0, %s272
      %s274 = sphi 0, %s272
      %s275 = sphi 0, %s274
      %s289 = sphi 0, %s275
      %s293 = sphi 0, %s293
      %s295 = sphi 0, %s293
      %s296 = sphi 0, %s295
      %s310 = sphi 0, %s296
      %s316 = sphi 0, %s318
      %s319 = sphi 0, %s316
      %s320 = sphi 0, %s319
      %s336 = sphi 0, %s320
    $region4: #{tpu_custom_call.1} parent=1 // loop_header_branch
      %32 = sbr.rel (%p30) target = $region8
    $region5: #{tpu_custom_call.1} parent=1 // loop_body
      %s34 = ssub.s32 %s29, 1
      %s35 = ssub.s32 %s29, 2
      %s36 = sadd.s32 %s29, 1
      %s37 = ssub.s32 %s29, %s36
      %p38 = scmp.eq.s32.totalorder %s37, 0
      %s40 = sadd.s32 %s39, 1
      %s41 = scalar_select %p38, %s39, %s40
      %p44 = pneg %p38
      %p45 = scmp.eq.s32.totalorder %s29, 1
      %p46 = por %p44, %p45
      %p47 = scmp.ne.s32.totalorder %s39, %s42
      %p48 = scmp.eq.s32.totalorder %s29, 0
      %p49 = por %p47, %p48
      %p50 = scmp.ne.s32.totalorder %s39, %s42
      %p51 = scmp.eq.s32.totalorder %s34, 1
      %p52 = por %p50, %p51
      %p53 = scmp.ne.s32.totalorder %s42, %s43
      %p54 = scmp.eq.s32.totalorder %s34, 0
      %p55 = por %p53, %p54
      %p56 = scmp.ne.s32.totalorder %s42, %s43
      %p57 = scmp.eq.s32.totalorder %s35, 1
      %p58 = por %p56, %p57
      %p60 = scmp.ne.s32.totalorder %s43, %s59
      %p61 = scmp.eq.s32.totalorder %s35, 0
      %p62 = por %p60, %p61
      %s63 = ssub.s32 %s29, %s36
      %p64 = scmp.eq.s32.totalorder %s63, 0
      %s66 = sadd.s32 %s65, 1
      %s67 = scalar_select %p64, %s65, %s66
      %p70 = pneg %p64
      %p71 = scmp.eq.s32.totalorder %s29, 1
      %p72 = por %p70, %p71
      %p73 = scmp.ne.s32.totalorder %s65, %s68
      %p74 = scmp.eq.s32.totalorder %s29, 0
      %p75 = por %p73, %p74
      %p76 = scmp.ne.s32.totalorder %s65, %s68
      %p77 = scmp.eq.s32.totalorder %s34, 1
      %p78 = por %p76, %p77
      %p79 = scmp.ne.s32.totalorder %s68, %s69
      %p80 = scmp.eq.s32.totalorder %s34, 0
      %p81 = por %p79, %p80
      %p82 = scmp.ne.s32.totalorder %s68, %s69
      %p83 = scmp.eq.s32.totalorder %s35, 1
      %p84 = por %p82, %p83
      %p86 = scmp.ne.s32.totalorder %s69, %s85
      %p87 = scmp.eq.s32.totalorder %s35, 0
      %p88 = por %p86, %p87
      %s89 = ssub.s32 %s29, %s36
      %p90 = scmp.eq.s32.totalorder %s89, 0
      %s92 = sadd.s32 %s91, 1
      %s93 = scalar_select %p90, %s91, %s92
      %p96 = pneg %p90
      %p97 = scmp.eq.s32.totalorder %s29, 1
      %p98 = por %p96, %p97
      %p99 = scmp.ne.s32.totalorder %s91, %s94
      %p100 = scmp.eq.s32.totalorder %s29, 0
      %p101 = por %p99, %p100
      %p102 = scmp.ne.s32.totalorder %s91, %s94
      %p103 = scmp.eq.s32.totalorder %s34, 1
      %p104 = por %p102, %p103
      %p105 = scmp.ne.s32.totalorder %s94, %s95
      %p106 = scmp.eq.s32.totalorder %s34, 0
      %p107 = por %p105, %p106
      %p108 = scmp.ne.s32.totalorder %s94, %s95
      %p109 = scmp.eq.s32.totalorder %s35, 1
      %p110 = por %p108, %p109
      %p112 = scmp.ne.s32.totalorder %s95, %s111
      %p113 = scmp.eq.s32.totalorder %s35, 0
      %p114 = por %p112, %p113
      %s115 = ssub.s32 %s29, %s36
      %p116 = scmp.eq.s32.totalorder %s115, 0
      %s118 = sadd.s32 %s117, 1
      %s119 = scalar_select %p116, %s117, %s118
      %p122 = pneg %p116
      %p123 = scmp.eq.s32.totalorder %s29, 1
      %p124 = por %p122, %p123
      %p125 = scmp.ne.s32.totalorder %s117, %s120
      %p126 = scmp.eq.s32.totalorder %s29, 0
      %p127 = por %p125, %p126
      %p128 = scmp.ne.s32.totalorder %s117, %s120
      %p129 = scmp.eq.s32.totalorder %s34, 1
      %p130 = por %p128, %p129
      %p131 = scmp.ne.s32.totalorder %s120, %s121
      %p132 = scmp.eq.s32.totalorder %s34, 0
      %p133 = por %p131, %p132
      %p134 = scmp.ne.s32.totalorder %s120, %s121
      %p135 = scmp.eq.s32.totalorder %s35, 1
      %p136 = por %p134, %p135
      %p138 = scmp.ne.s32.totalorder %s121, %s137
      %p139 = scmp.eq.s32.totalorder %s35, 0
      %p140 = por %p138, %p139
      %s141 = ssub.s32 %s29, %s36
      %p142 = scmp.eq.s32.totalorder %s141, 0
      %s144 = sadd.s32 %s143, 1
      %s145 = scalar_select %p142, %s143, %s144
      %p148 = pneg %p142
      %p149 = scmp.eq.s32.totalorder %s29, 1
      %p150 = por %p148, %p149
      %p151 = scmp.ne.s32.totalorder %s143, %s146
      %p152 = scmp.eq.s32.totalorder %s29, 0
      %p153 = por %p151, %p152
      %p154 = scmp.ne.s32.totalorder %s143, %s146
      %p155 = scmp.eq.s32.totalorder %s34, 1
      %p156 = por %p154, %p155
      %p157 = scmp.ne.s32.totalorder %s146, %s147
      %p158 = scmp.eq.s32.totalorder %s34, 0
      %p159 = por %p157, %p158
      %p160 = scmp.ne.s32.totalorder %s146, %s147
      %p161 = scmp.eq.s32.totalorder %s35, 1
      %p162 = por %p160, %p161
      %p164 = scmp.ne.s32.totalorder %s147, %s163
      %p165 = scmp.eq.s32.totalorder %s35, 0
      %p166 = por %p164, %p165
      %s168 = sadd.s32 %s167, 1
      %p171 = scmp.eq.s32.totalorder %s29, 1
      %p172 = scmp.ne.s32.totalorder %s167, %s169
      %p173 = scmp.eq.s32.totalorder %s29, 0
      %p174 = por %p172, %p173
      %p175 = scmp.ne.s32.totalorder %s167, %s169
      %p176 = scmp.eq.s32.totalorder %s34, 1
      %p177 = por %p175, %p176
      %p178 = scmp.ne.s32.totalorder %s169, %s170
      %p179 = scmp.eq.s32.totalorder %s34, 0
      %p180 = por %p178, %p179
      %p181 = scmp.ne.s32.totalorder %s169, %s170
      %p182 = scmp.eq.s32.totalorder %s35, 1
      %p183 = por %p181, %p182
      %p185 = scmp.ne.s32.totalorder %s170, %s184
      %p186 = scmp.eq.s32.totalorder %s35, 0
      %p187 = por %p185, %p186
      %s189 = sadd.s32 %s188, 1
      %p192 = scmp.eq.s32.totalorder %s29, 1
      %p193 = scmp.ne.s32.totalorder %s188, %s190
      %p194 = scmp.eq.s32.totalorder %s29, 0
      %p195 = por %p193, %p194
      %p196 = scmp.ne.s32.totalorder %s188, %s190
      %p197 = scmp.eq.s32.totalorder %s34, 1
      %p198 = por %p196, %p197
      %p199 = scmp.ne.s32.totalorder %s190, %s191
      %p200 = scmp.eq.s32.totalorder %s34, 0
      %p201 = por %p199, %p200
      %p202 = scmp.ne.s32.totalorder %s190, %s191
      %p203 = scmp.eq.s32.totalorder %s35, 1
      %p204 = por %p202, %p203
      %p206 = scmp.ne.s32.totalorder %s191, %s205
      %p207 = scmp.eq.s32.totalorder %s35, 0
      %p208 = por %p206, %p207
      %s210 = sadd.s32 %s209, 1
      %p213 = scmp.eq.s32.totalorder %s29, 1
      %p214 = scmp.ne.s32.totalorder %s209, %s211
      %p215 = scmp.eq.s32.totalorder %s29, 0
      %p216 = por %p214, %p215
      %p217 = scmp.ne.s32.totalorder %s209, %s211
      %p218 = scmp.eq.s32.totalorder %s34, 1
      %p219 = por %p217, %p218
      %p220 = scmp.ne.s32.totalorder %s211, %s212
      %p221 = scmp.eq.s32.totalorder %s34, 0
      %p222 = por %p220, %p221
      %p223 = scmp.ne.s32.totalorder %s211, %s212
      %p224 = scmp.eq.s32.totalorder %s35, 1
      %p225 = por %p223, %p224
      %p227 = scmp.ne.s32.totalorder %s212, %s226
      %p228 = scmp.eq.s32.totalorder %s35, 0
      %p229 = por %p227, %p228
      %s231 = sadd.s32 %s230, 1
      %p234 = scmp.eq.s32.totalorder %s29, 1
      %p235 = scmp.ne.s32.totalorder %s230, %s232
      %p236 = scmp.eq.s32.totalorder %s29, 0
      %p237 = por %p235, %p236
      %p238 = scmp.ne.s32.totalorder %s230, %s232
      %p239 = scmp.eq.s32.totalorder %s34, 1
      %p240 = por %p238, %p239
      %p241 = scmp.ne.s32.totalorder %s232, %s233
      %p242 = scmp.eq.s32.totalorder %s34, 0
      %p243 = por %p241, %p242
      %p244 = scmp.ne.s32.totalorder %s232, %s233
      %p245 = scmp.eq.s32.totalorder %s35, 1
      %p246 = por %p244, %p245
      %p248 = scmp.ne.s32.totalorder %s233, %s247
      %p249 = scmp.eq.s32.totalorder %s35, 0
      %p250 = por %p248, %p249
      %s252 = sadd.s32 %s251, 1
      %p255 = scmp.eq.s32.totalorder %s29, 1
      %p256 = scmp.ne.s32.totalorder %s251, %s253
      %p257 = scmp.eq.s32.totalorder %s29, 0
      %p258 = por %p256, %p257
      %p259 = scmp.ne.s32.totalorder %s251, %s253
      %p260 = scmp.eq.s32.totalorder %s34, 1
      %p261 = por %p259, %p260
      %p262 = scmp.ne.s32.totalorder %s253, %s254
      %p263 = scmp.eq.s32.totalorder %s34, 0
      %p264 = por %p262, %p263
      %p265 = scmp.ne.s32.totalorder %s253, %s254
      %p266 = scmp.eq.s32.totalorder %s35, 1
      %p267 = por %p265, %p266
      %p269 = scmp.ne.s32.totalorder %s254, %s268
      %p270 = scmp.eq.s32.totalorder %s35, 0
      %p271 = por %p269, %p270
      %s273 = sadd.s32 %s272, 1
      %p276 = scmp.eq.s32.totalorder %s29, 1
      %p277 = scmp.ne.s32.totalorder %s272, %s274
      %p278 = scmp.eq.s32.totalorder %s29, 0
      %p279 = por %p277, %p278
      %p280 = scmp.ne.s32.totalorder %s272, %s274
      %p281 = scmp.eq.s32.totalorder %s34, 1
      %p282 = por %p280, %p281
      %p283 = scmp.ne.s32.totalorder %s274, %s275
      %p284 = scmp.eq.s32.totalorder %s34, 0
      %p285 = por %p283, %p284
      %p286 = scmp.ne.s32.totalorder %s274, %s275
      %p287 = scmp.eq.s32.totalorder %s35, 1
      %p288 = por %p286, %p287
      %p290 = scmp.ne.s32.totalorder %s275, %s289
      %p291 = scmp.eq.s32.totalorder %s35, 0
      %p292 = por %p290, %p291
      %s294 = sadd.s32 %s293, 1
      %p297 = scmp.eq.s32.totalorder %s29, 1
      %p298 = scmp.ne.s32.totalorder %s293, %s295
      %p299 = scmp.eq.s32.totalorder %s29, 0
      %p300 = por %p298, %p299
      %p301 = scmp.ne.s32.totalorder %s293, %s295
      %p302 = scmp.eq.s32.totalorder %s34, 1
      %p303 = por %p301, %p302
      %p304 = scmp.ne.s32.totalorder %s295, %s296
      %p305 = scmp.eq.s32.totalorder %s34, 0
      %p306 = por %p304, %p305
      %p307 = scmp.ne.s32.totalorder %s295, %s296
      %p308 = scmp.eq.s32.totalorder %s35, 1
      %p309 = por %p307, %p308
      %p311 = scmp.ne.s32.totalorder %s296, %s310
      %p312 = scmp.eq.s32.totalorder %s35, 0
      %p313 = por %p311, %p312
      %s314 = ssub.s32 %s29, %s36
      %p315 = scmp.eq.s32.totalorder %s314, 0
      %s317 = sadd.s32 %s316, 1
      %s318 = scalar_select %p315, %s316, %s317
      %p321 = pneg %p315
      %p322 = scmp.eq.s32.totalorder %s29, 1
      %p323 = por %p321, %p322
      %p324 = scmp.ne.s32.totalorder %s316, %s319
      %p325 = scmp.eq.s32.totalorder %s29, 0
      %p326 = por %p324, %p325
      %p327 = scmp.ne.s32.totalorder %s316, %s319
      %p328 = scmp.eq.s32.totalorder %s34, 1
      %p329 = por %p327, %p328
      %p330 = scmp.ne.s32.totalorder %s319, %s320
      %p331 = scmp.eq.s32.totalorder %s34, 0
      %p332 = por %p330, %p331
      %p333 = scmp.ne.s32.totalorder %s319, %s320
      %p334 = scmp.eq.s32.totalorder %s35, 1
      %p335 = por %p333, %p334
      %p337 = scmp.ne.s32.totalorder %s320, %s336
      %p338 = scmp.eq.s32.totalorder %s35, 0
      %p339 = por %p337, %p338
      %p340 = scmp.le.s32.totalorder 1, %s29
      %p341 = scmp.lt.s32.totalorder %s29, 3
      %p342 = pnand %p340, %p341
      %p343 = pneg %p342
      // Predicated region
      $region9: #{tpu_custom_call.1} parent=5 // pred_check
        _
      $region10: #{tpu_custom_call.1} parent=5 // pred_check_branch
        %345 = sbr.rel (%p342) target = $region12
      $region11: #{tpu_custom_call.1} parent=5 // pred_region
        %s346 = ssub.s32 %s29, 1
        // Predicated region
        $region13: #{tpu_custom_call.1} parent=11 // pred_check
          %p347 = pneg %p180
        $region14: #{tpu_custom_call.1} parent=11 // pred_check_branch
          %349 = sbr.rel (%p347) target = $region16
        $region15: #{tpu_custom_call.1} parent=11 // pred_region
          _
        $region16: #{tpu_custom_call.1} parent=11 // pred_fallthru
          _
        // Predicated region
        $region17: #{tpu_custom_call.1} parent=11 // pred_check
          %p350 = pneg %p201
        $region18: #{tpu_custom_call.1} parent=11 // pred_check_branch
          %352 = sbr.rel (%p350) target = $region20
        $region19: #{tpu_custom_call.1} parent=11 // pred_region
          _
        $region20: #{tpu_custom_call.1} parent=11 // pred_fallthru
          _
        // Predicated region
        $region21: #{tpu_custom_call.1} parent=11 // pred_check
          %p353 = pneg %p222
        $region22: #{tpu_custom_call.1} parent=11 // pred_check_branch
          %355 = sbr.rel (%p353) target = $region24
        $region23: #{tpu_custom_call.1} parent=11 // pred_region
          _
        $region24: #{tpu_custom_call.1} parent=11 // pred_fallthru
          _
        // Predicated region
        $region25: #{tpu_custom_call.1} parent=11 // pred_check
          %p356 = pneg %p243
        $region26: #{tpu_custom_call.1} parent=11 // pred_check_branch
          %358 = sbr.rel (%p356) target = $region28
        $region27: #{tpu_custom_call.1} parent=11 // pred_region
          %s360 = ssub.s32 16, 16
          %361 = vsyncadd [#allocation6], %s360
          %s363 = sshll.u32 %s8, 4
          %s364 = int_to_ptr.vmem [resolvable:$true] %s363
          %366 = dma.vmem_to_smem %s364, 16, [#allocation10], [#allocation6]
        $region28: #{tpu_custom_call.1} parent=11 // pred_fallthru
          _
        // Predicated region
        $region29: #{tpu_custom_call.1} parent=11 // pred_check
          %p367 = pneg %p264
        $region30: #{tpu_custom_call.1} parent=11 // pred_check_branch
          %369 = sbr.rel (%p367) target = $region32
        $region31: #{tpu_custom_call.1} parent=11 // pred_region
          _
        $region32: #{tpu_custom_call.1} parent=11 // pred_fallthru
          _
        // Predicated region
        $region33: #{tpu_custom_call.1} parent=11 // pred_check
          %p370 = pneg %p285
        $region34: #{tpu_custom_call.1} parent=11 // pred_check_branch
          %372 = sbr.rel (%p370) target = $region36
        $region35: #{tpu_custom_call.1} parent=11 // pred_region
          _
        $region36: #{tpu_custom_call.1} parent=11 // pred_fallthru
          _
        // Predicated region
        $region37: #{tpu_custom_call.1} parent=11 // pred_check
          %p373 = pneg %p306
        $region38: #{tpu_custom_call.1} parent=11 // pred_check_branch
          %375 = sbr.rel (%p373) target = $region40
        $region39: #{tpu_custom_call.1} parent=11 // pred_region
          _
        $region40: #{tpu_custom_call.1} parent=11 // pred_fallthru
          _
      $region12: #{tpu_custom_call.1} parent=5 // pred_fallthru
        _
      %p376 = scmp.lt.s32.totalorder %s29, 2
      // Predicated region
      $region41: #{tpu_custom_call.1} parent=5 // pred_check
        %p377 = pneg %p376
      $region42: #{tpu_custom_call.1} parent=5 // pred_check_branch
        %379 = sbr.rel (%p377) target = $region44
      $region43: #{tpu_custom_call.1} parent=5 // pred_region
        // Predicated region
        $region45: #{tpu_custom_call.1} parent=43 // pred_check
          %p380 = pneg %p49
        $region46: #{tpu_custom_call.1} parent=43 // pred_check_branch
          %382 = sbr.rel (%p380) target = $region48
        $region47: #{tpu_custom_call.1} parent=43 // pred_region
          %p383 = scmp.lt.s32.totalorder %s29, 1
          %s384 = scalar_select %p383, %s29, 1
          %s385 = smul.addr %s384, 4
          %s386 = smul.addr %s385, 4
          %s387 = scalar_lea.vmem %s0, %s386
        $region48: #{tpu_custom_call.1} parent=43 // pred_fallthru
          _
        // Predicated region
        $region49: #{tpu_custom_call.1} parent=43 // pred_check
          %p388 = pneg %p75
        $region50: #{tpu_custom_call.1} parent=43 // pred_check_branch
          %390 = sbr.rel (%p388) target = $region52
        $region51: #{tpu_custom_call.1} parent=43 // pred_region
          %s391 = sand.u32 %s65, 1
          %s392 = scalar_lea.sflag [#allocation4], %s391
          %s393 = sand.u32 %s65, 1
          %s394 = smul.addr %s393, 4
          %s395 = scalar_lea.vmem [#allocation3], %s394
          %s397 = ssub.s32 64, 64
          %398 = vsyncadd %s392, %s397
          %s399 = smul.addr %s29, 2
          %s400 = smul.addr %s399, 32
          %s401 = scalar_lea.hbm %s1, %s400
          %s403 = sshll.u32 %s395, 4
          %s404 = int_to_ptr.vmem [resolvable:$true] %s403
          %406 = dma.hbm_to_vmem [thread:$0]  %s401, 64, %s404, %s392
        $region52: #{tpu_custom_call.1} parent=43 // pred_fallthru
          _
        // Predicated region
        $region53: #{tpu_custom_call.1} parent=43 // pred_check
          %p407 = pneg %p101
        $region54: #{tpu_custom_call.1} parent=43 // pred_check_branch
          %409 = sbr.rel (%p407) target = $region56
        $region55: #{tpu_custom_call.1} parent=43 // pred_region
          %s410 = sand.u32 %s29, 1
          %s411 = scalar_lea.sflag [#allocation8], %s410
          %s412 = sand.u32 %s91, 1
          %s413 = smul.addr %s412, 4
          %s414 = scalar_lea.vmem [#allocation7], %s413
          %s416 = ssub.s32 64, 64
          %417 = vsyncadd %s411, %s416
          %s418 = smul.addr %s29, 2
          %s419 = smul.addr %s418, 32
          %s420 = scalar_lea.hbm %s2, %s419
          %s422 = sshll.u32 %s414, 4
          %s423 = int_to_ptr.vmem [resolvable:$true] %s422
          %425 = dma.hbm_to_vmem [thread:$0]  %s420, 64, %s423, %s411
        $region56: #{tpu_custom_call.1} parent=43 // pred_fallthru
          _
        // Predicated region
        $region57: #{tpu_custom_call.1} parent=43 // pred_check
          %p426 = pneg %p127
        $region58: #{tpu_custom_call.1} parent=43 // pred_check_branch
          %428 = sbr.rel (%p426) target = $region60
        $region59: #{tpu_custom_call.1} parent=43 // pred_region
          %p429 = scmp.lt.s32.totalorder %s29, 1
          %s430 = scalar_select %p429, %s29, 1
          %s431 = smul.addr %s430, 2
          %s432 = smul.addr %s431, 2
          %s433 = scalar_lea.vmem %s3, %s432
        $region60: #{tpu_custom_call.1} parent=43 // pred_fallthru
          _
        // Predicated region
        $region61: #{tpu_custom_call.1} parent=43 // pred_check
          %p434 = pneg %p153
        $region62: #{tpu_custom_call.1} parent=43 // pred_check_branch
          %436 = sbr.rel (%p434) target = $region64
        $region63: #{tpu_custom_call.1} parent=43 // pred_region
          %s437 = sand.u32 %s29, 1
          %s438 = scalar_lea.sflag [#allocation8], %s437
          %s439 = sand.u32 %s143, 1
          %s440 = smul.addr %s439, 4
          %s441 = scalar_lea.vmem [#allocation9], %s440
          %s443 = ssub.s32 64, 64
          %444 = vsyncadd %s438, %s443
          %s445 = smul.addr %s29, 2
          %s446 = smul.addr %s445, 32
          %s447 = scalar_lea.hbm %s4, %s446
          %s449 = sshll.u32 %s441, 4
          %s450 = int_to_ptr.vmem [resolvable:$true] %s449
          %452 = dma.hbm_to_vmem [thread:$0]  %s447, 64, %s450, %s438
        $region64: #{tpu_custom_call.1} parent=43 // pred_fallthru
          _
      $region44: #{tpu_custom_call.1} parent=5 // pred_fallthru
        _
      %p453 = scmp.le.s32.totalorder 1, %s29
      %p454 = scmp.lt.s32.totalorder %s29, 3
      %p455 = pnand %p453, %p454
      %p456 = pneg %p455
      // Predicated region
      $region65: #{tpu_custom_call.1} parent=5 // pred_check
        _
      $region66: #{tpu_custom_call.1} parent=5 // pred_check_branch
        %458 = sbr.rel (%p455) target = $region68
      $region67: #{tpu_custom_call.1} parent=5 // pred_region
        %s459 = ssub.s32 %s29, 1
        %s460 = sand.u32 %s68, 1
        %s461 = scalar_lea.sflag [#allocation4], %s460
        %s462 = sand.u32 %s68, 1
        %s463 = smul.addr %s462, 4
        %s464 = scalar_lea.vmem [#allocation3], %s463
        // Predicated region
        $region69: #{tpu_custom_call.1} parent=67 // pred_check
          %p465 = pneg %p81
        $region70: #{tpu_custom_call.1} parent=67 // pred_check_branch
          %467 = sbr.rel (%p465) target = $region72
        $region71: #{tpu_custom_call.1} parent=67 // pred_region
          %468 = dma.done %s461, 64
        $region72: #{tpu_custom_call.1} parent=67 // pred_fallthru
          _
        %s469 = sand.u32 %s34, 1
        %s470 = scalar_lea.sflag [#allocation8], %s469
        %s471 = sand.u32 %s94, 1
        %s472 = smul.addr %s471, 4
        %s473 = scalar_lea.vmem [#allocation7], %s472
        // Predicated region
        $region73: #{tpu_custom_call.1} parent=67 // pred_check
          %p474 = pneg %p107
        $region74: #{tpu_custom_call.1} parent=67 // pred_check_branch
          %476 = sbr.rel (%p474) target = $region76
        $region75: #{tpu_custom_call.1} parent=67 // pred_region
          %477 = dma.done %s470, 64
        $region76: #{tpu_custom_call.1} parent=67 // pred_fallthru
          _
        %s478 = sand.u32 %s34, 1
        %s479 = scalar_lea.sflag [#allocation8], %s478
        %s480 = sand.u32 %s146, 1
        %s481 = smul.addr %s480, 4
        %s482 = scalar_lea.vmem [#allocation9], %s481
        // Predicated region
        $region77: #{tpu_custom_call.1} parent=67 // pred_check
          %p483 = pneg %p159
        $region78: #{tpu_custom_call.1} parent=67 // pred_check_branch
          %485 = sbr.rel (%p483) target = $region80
        $region79: #{tpu_custom_call.1} parent=67 // pred_region
          %486 = dma.done %s479, 64
        $region80: #{tpu_custom_call.1} parent=67 // pred_fallthru
          _
        // Predicated region
        $region81: #{tpu_custom_call.1} parent=67 // pred_check
          %p487 = pneg %p243
        $region82: #{tpu_custom_call.1} parent=67 // pred_check_branch
          %489 = sbr.rel (%p487) target = $region84
        $region83: #{tpu_custom_call.1} parent=67 // pred_region
          %490 = dma.done [#allocation6], 16
        $region84: #{tpu_custom_call.1} parent=67 // pred_fallthru
          _
        %491 = sfence
        %p492 = scmp.lt.s32.totalorder %s34, 1
        %s493 = scalar_select %p492, %s34, 1
        %s494 = smul.addr %s493, 4
        %s495 = smul.addr %s494, 4
        %s496 = scalar_lea.vmem %s0, %s495
        %p497 = pneg %p55
        %p498 = pneg %p52
        %s499 = sand.u32 %s68, 1
        %s500 = scalar_lea.sflag [#allocation4], %s499
        %s501 = sand.u32 %s68, 1
        %s502 = smul.addr %s501, 4
        %s503 = scalar_lea.vmem [#allocation3], %s502
        %p504 = pneg %p81
        %p505 = pneg %p78
        %s506 = sand.u32 %s34, 1
        %s507 = scalar_lea.sflag [#allocation8], %s506
        %s508 = sand.u32 %s94, 1
        %s509 = smul.addr %s508, 4
        %s510 = scalar_lea.vmem [#allocation7], %s509
        %p511 = pneg %p107
        %p512 = pneg %p104
        %p513 = scmp.lt.s32.totalorder %s34, 1
        %s514 = scalar_select %p513, %s34, 1
        %s515 = smul.addr %s514, 2
        %s516 = smul.addr %s515, 2
        %s517 = scalar_lea.vmem %s3, %s516
        %p518 = pneg %p133
        %p519 = pneg %p130
        %s520 = sand.u32 %s34, 1
        %s521 = scalar_lea.sflag [#allocation8], %s520
        %s522 = sand.u32 %s146, 1
        %s523 = smul.addr %s522, 4
        %s524 = scalar_lea.vmem [#allocation9], %s523
        %p525 = pneg %p159
        %p526 = pneg %p156
        %p527 = pneg %p180
        %p528 = pneg %p177
        %p529 = pneg %p201
        %p530 = pneg %p198
        %p531 = pneg %p222
        %p532 = pneg %p219
        %p533 = pneg %p243
        %p534 = pneg %p240
        %p535 = pneg %p264
        %p536 = pneg %p261
        %p537 = pneg %p285
        %p538 = pneg %p282
        %p539 = pneg %p306
        %p540 = pneg %p303
        %p541 = pneg %p332
        %p542 = pneg %p329
        %s543 = sand.u32 %s319, 1
        %s544 = scalar_lea.sflag [#allocation5], %s543
        %s545 = sand.u32 %s319, 1
        %s546 = smul.addr %s545, 16
        %s547 = scalar_lea.vmem [#allocation11], %s546
        %p548 = scmp.lt.s32.totalorder %s34, 1
        %s549 = scalar_select %p548, %s34, 1
        %s550 = smul.addr %s549, 4
        %s551 = smul.addr %s550, 4
        %s552 = scalar_lea.vmem %s0, %s551
        %p553 = scmp.lt.s32.totalorder %s34, 1
        %s554 = scalar_select %p553, %s34, 1
        %s555 = smul.addr %s554, 2
        %s556 = smul.addr %s555, 2
        %s557 = scalar_lea.vmem %s3, %s556
        %v558 = vld [vmem:[%s552] sm:$0xff]
        %v559 = vld [vmem:[%s552 + $0x8] sm:$0xff]
        %v560 = vunpack.c.l.bf16 %v558
        %v561 = vunpack.c.h.bf16 %v558
        %v562 = vunpack.c.l.bf16 %v559
        %v563 = vunpack.c.h.bf16 %v559
        %v564 = vld [vmem:[%s7] sm:$0xff]
        %v565 = vld [vmem:[%s7 + $0x8] sm:$0xff]
        %v566 = vld [vmem:[%s7 + $0x10] sm:$0x1]
        %v567 = vld [vmem:[%s7 + $0x18] sm:$0x1]
        %v568 = vld [vmem:[%s5] sm:$0xff]
        %v569 = vld [vmem:[%s5 + $0x8] sm:$0xff]
        %v570 = vld [vmem:[%s5 + $0x10] sm:$0xff]
        %v571 = vld [vmem:[%s5 + $0x18] sm:$0xff]
        %v572 = vld [vmem:[%s5 + $0x20] sm:$0xf]
        %vm573 = vcmask 130048
        %v575 = vsel %vm573, %v568, 0
        %v578 = vsel %vm573, %v569, 0
        %v581 = vsel %vm573, %v570, 0
        %v584 = vsel %vm573, %v571, 0
        %v587 = vsel %vm573, %v572, 0
        %589 = vmatprep.subr.mxu0 0.0
        %590 = vmatpush1.msra.mxu0 0.0
        %591 = vmatprep.subr.mxu0 0.0
        %592 = vmatpush1.msra.mxu0 0.0
        %593 = vmatprep.subr.mxu0 0.0
        %594 = vmatpush1.msra.mxu0 0.0
        %595 = vmatprep.subr.mxu0 0.0
        %596 = vmatpush1.msra.mxu0 0.0
        %597 = vmatprep.subr.mxu0 0.0
        %598 = vmatpush1.msra.mxu0 0.0
        %599 = vmatprep.subr.mxu0 0.0
        %600 = vmatpush1.msra.mxu0 0.0
        %601 = vmatprep.subr.mxu0 0.0
        %602 = vmatpush1.msra.mxu0 0.0
        %603 = vmatprep.subr.mxu0 0.0
        %604 = vmatpush1.msra.mxu0 0.0
        %605 = vmatprep.subr.mxu0 0.0
        %606 = vmatpush1.msra.mxu0 0.0
        %607 = vmatprep.subr.mxu0 0.0
        %608 = vmatpush1.msra.mxu0 0.0
        %609 = vmatprep.subr.mxu0 0.0
        %610 = vmatpush1.msra.mxu0 0.0
        %611 = vmatprep.subr.mxu0 0.0
        %612 = vmatpush1.msra.mxu0 0.0
        %613 = vmatprep.subr.mxu0 0.0
        %614 = vmatpush1.msra.mxu0 0.0
        %615 = vmatprep.subr.mxu0 0.0
        %616 = vmatpush1.msra.mxu0 0.0
        %617 = vmatprep.subr.mxu0 %v563
        %618 = vmatpush1.msra.mxu0 %v562
        %619 = vmatprep.subr.mxu0 %v561
        %620 = vmatpush1.msra.mxu0 %v560
        %621 = vmatprep.subr.mxu0 0.0
        %622 = vmatpush2.msra.mxu0 0.0
        %623 = vmatprep.subr.mxu0 0.0
        %624 = vmatpush2.msra.mxu0 0.0
        %625 = vmatprep.subr.mxu0 0.0
        %626 = vmatpush2.msra.mxu0 0.0
        %627 = vmatprep.subr.mxu0 0.0
        %628 = vmatpush2.msra.mxu0 0.0
        %629 = vmatprep.subr.mxu0 0.0
        %630 = vmatpush2.msra.mxu0 0.0
        %631 = vmatprep.subr.mxu0 0.0
        %632 = vmatpush2.msra.mxu0 0.0
        %633 = vmatprep.subr.mxu0 0.0
        %634 = vmatpush2.msra.mxu0 0.0
        %635 = vmatprep.subr.mxu0 0.0
        %636 = vmatpush2.msra.mxu0 0.0
        %637 = vmatprep.subr.mxu0 0.0
        %638 = vmatpush2.msra.mxu0 0.0
        %639 = vmatprep.subr.mxu0 0.0
        %640 = vmatpush2.msra.mxu0 0.0
        %641 = vmatprep.subr.mxu0 0.0
        %642 = vmatpush2.msra.mxu0 0.0
        %643 = vmatprep.subr.mxu0 0.0
        %644 = vmatpush2.msra.mxu0 0.0
        %645 = vmatprep.subr.mxu0 0.0
        %646 = vmatpush2.msra.mxu0 0.0
        %647 = vmatprep.subr.mxu0 0.0
        %648 = vmatpush2.msra.mxu0 0.0
        %649 = vmatprep.subr.mxu0 0.0
        %650 = vmatpush2.msra.mxu0 0.0
        %651 = vmatprep.subr.mxu0 0.0
        %652 = vmatpush2.msra.mxu0 0.0
        %653 = vmatprep.mubr.f32.mxu0 0.0
        %654 = vmatmul.mubr.f32.gmra.mxu0 %v575
        %v655 = vpop.f32.mrf.mxu0
        %v656 = vadd.f32 0.0, %v655
        %v657 = vpop.f32.mrf.mxu0
        %v658 = vadd.f32 0.0, %v657
        %659 = vmatprep.mubr.f32.mxu0 0.0
        %660 = vmatmul.mubr.f32.gmra.mxu0 %v578
        %v661 = vpop.f32.mrf.mxu0
        %v662 = vadd.f32 0.0, %v661
        %v663 = vpop.f32.mrf.mxu0
        %v664 = vadd.f32 0.0, %v663
        %665 = vmatprep.mubr.f32.mxu0 0.0
        %666 = vmatmul.mubr.f32.gmra.mxu0 %v581
        %v667 = vpop.f32.mrf.mxu0
        %v668 = vadd.f32 0.0, %v667
        %v669 = vpop.f32.mrf.mxu0
        %v670 = vadd.f32 0.0, %v669
        %671 = vmatprep.mubr.f32.mxu0 0.0
        %672 = vmatmul.mubr.f32.gmra.mxu0 %v584
        %v673 = vpop.f32.mrf.mxu0
        %v674 = vadd.f32 0.0, %v673
        %v675 = vpop.f32.mrf.mxu0
        %v676 = vadd.f32 0.0, %v675
        %677 = vmatprep.mubr.f32.mxu0 0.0
        %678 = vmatmul.mubr.f32.gmra.mxu0 %v587
        %v679 = vpop.f32.mrf.mxu0
        %v680 = vadd.f32 0.0, %v679
        %v681 = vpop.f32.mrf.mxu0
        %v682 = vadd.f32 0.0, %v681
        %683 = vdwg.mxu0
        %684 = vrot.lane.b32.xlu0 %v656, 17
        %v685 = vpop.permute.xlu0 %684
        %686 = vrot.lane.b32.xlu0 %v658, 17
        %v687 = vpop.permute.xlu0 %686
        %v688 = vlaneseq
        %v689 = vand.u32 %v688, 127
        %vm690 = vcmp.lt.s32.totalorder %v689, 17
        %v691 = vsel %vm690, %v685, %v687
        %v692 = vsel %vm690, %v687, %v685
        %v693 = vlaneseq
        %v694 = vshrl.u32 %v693, 7
        %v695 = vsub.s32 0, %v694
        %v696 = vrot.slane %v564, %v695
        %v697 = vlaneseq
        %v698 = vshrl.u32 %v697, 7
        %v699 = vsub.s32 0, %v698
        %v700 = vrot.slane %v565, %v699
        %v701 = vmul.f32 %v696, %v692
        %v702 = vmul.f32 %v700, %v691
        %v703 = vadd.f32 %v701, 0.0
        %v704 = vadd.f32 %v702, 0.0
        %v707 = vrot.slane %v656, 4
        %v708 = vrot.slane %v658, 4
        %711 = vrot.lane.b32.xlu0 %v707, 16
        %v712 = vpop.permute.xlu0 %711
        %713 = vrot.lane.b32.xlu0 %v708, 16
        %v714 = vpop.permute.xlu0 %713
        %vm715 = vcmp.lt.s32.totalorder %v689, 16
        %v716 = vsel %vm715, %v712, %v714
        %v717 = vsel %vm715, %v714, %v712
        %v718 = vlaneseq
        %v719 = vshrl.u32 %v718, 7
        %v720 = vsub.s32 1, %v719
        %v721 = vrot.slane %v564, %v720
        %v722 = vlaneseq
        %v723 = vshrl.u32 %v722, 7
        %v724 = vsub.s32 1, %v723
        %v725 = vrot.slane %v565, %v724
        %v726 = vmul.f32 %v721, %v717
        %v727 = vmul.f32 %v725, %v716
        %v728 = vadd.f32 %v703, %v726
        %v729 = vadd.f32 %v704, %v727
        %730 = vrot.lane.b32.xlu0 %v662, 15
        %v731 = vpop.permute.xlu0 %730
        %732 = vrot.lane.b32.xlu0 %v664, 15
        %v733 = vpop.permute.xlu0 %732
        %vm734 = vcmp.lt.s32.totalorder %v689, 15
        %v735 = vsel %vm734, %v731, %v733
        %v736 = vsel %vm734, %v733, %v731
        %v737 = vlaneseq
        %v738 = vshrl.u32 %v737, 7
        %v739 = vsub.s32 2, %v738
        %v740 = vrot.slane %v564, %v739
        %v741 = vlaneseq
        %v742 = vshrl.u32 %v741, 7
        %v743 = vsub.s32 2, %v742
        %v744 = vrot.slane %v565, %v743
        %v745 = vmul.f32 %v740, %v736
        %v746 = vmul.f32 %v744, %v735
        %v747 = vadd.f32 %v728, %v745
        %v748 = vadd.f32 %v729, %v746
        %v751 = vrot.slane %v662, 4
        %v752 = vrot.slane %v664, 4
        %755 = vrot.lane.b32.xlu0 %v751, 1
        %v756 = vpop.permute.xlu0 %755
        %757 = vrot.lane.b32.xlu0 %v752, 1
        %v758 = vpop.permute.xlu0 %757
        %vm759 = vcmp.lt.s32.totalorder %v689, 1
        %v760 = vsel %vm759, %v756, %v758
        %v761 = vsel %vm759, %v758, %v756
        %v762 = vlaneseq
        %v763 = vshrl.u32 %v762, 7
        %v764 = vsub.s32 3, %v763
        %v765 = vrot.slane %v564, %v764
        %v766 = vlaneseq
        %v767 = vshrl.u32 %v766, 7
        %v768 = vsub.s32 3, %v767
        %v769 = vrot.slane %v565, %v768
        %v770 = vmul.f32 %v765, %v761
        %v771 = vmul.f32 %v769, %v760
        %v772 = vadd.f32 %v747, %v770
        %v773 = vadd.f32 %v748, %v771
        %v774 = vlaneseq
        %v775 = vshrl.u32 %v774, 7
        %v776 = vsub.s32 4, %v775
        %v777 = vrot.slane %v564, %v776
        %v778 = vlaneseq
        %v779 = vshrl.u32 %v778, 7
        %v780 = vsub.s32 4, %v779
        %v781 = vrot.slane %v565, %v780
        %v782 = vmul.f32 %v777, %v668
        %v783 = vmul.f32 %v781, %v670
        %v784 = vadd.f32 %v772, %v782
        %v785 = vadd.f32 %v773, %v783
        %v788 = vrot.slane %v668, 4
        %v789 = vrot.slane %v670, 4
        %792 = vrot.lane.b32.xlu0 %v788, 127
        %v793 = vpop.permute.xlu0 %792
        %794 = vrot.lane.b32.xlu0 %v789, 127
        %v795 = vpop.permute.xlu0 %794
        %vm796 = vcmp.lt.s32.totalorder %v689, 127
        %v797 = vsel %vm796, %v793, %v795
        %v798 = vsel %vm796, %v795, %v793
        %v799 = vlaneseq
        %v800 = vshrl.u32 %v799, 7
        %v801 = vsub.s32 5, %v800
        %v802 = vrot.slane %v564, %v801
        %v803 = vlaneseq
        %v804 = vshrl.u32 %v803, 7
        %v805 = vsub.s32 5, %v804
        %v806 = vrot.slane %v565, %v805
        %v807 = vmul.f32 %v802, %v797
        %v808 = vmul.f32 %v806, %v798
        %v809 = vadd.f32 %v784, %v807
        %v810 = vadd.f32 %v785, %v808
        %811 = vrot.lane.b32.xlu0 %v674, 113
        %v812 = vpop.permute.xlu0 %811
        %813 = vrot.lane.b32.xlu0 %v676, 113
        %v814 = vpop.permute.xlu0 %813
        %vm815 = vcmp.lt.s32.totalorder %v689, 113
        %v816 = vsel %vm815, %v812, %v814
        %v817 = vsel %vm815, %v814, %v812
        %v818 = vlaneseq
        %v819 = vshrl.u32 %v818, 7
        %v820 = vsub.s32 6, %v819
        %v821 = vrot.slane %v564, %v820
        %v822 = vlaneseq
        %v823 = vshrl.u32 %v822, 7
        %v824 = vsub.s32 6, %v823
        %v825 = vrot.slane %v565, %v824
        %v826 = vmul.f32 %v821, %v816
        %v827 = vmul.f32 %v825, %v817
        %v828 = vadd.f32 %v809, %v826
        %v829 = vadd.f32 %v810, %v827
        %v832 = vrot.slane %v674, 4
        %v833 = vrot.slane %v676, 4
        %836 = vrot.lane.b32.xlu0 %v832, 112
        %v837 = vpop.permute.xlu0 %836
        %838 = vrot.lane.b32.xlu0 %v833, 112
        %v839 = vpop.permute.xlu0 %838
        %vm840 = vcmp.lt.s32.totalorder %v689, 112
        %v841 = vsel %vm840, %v837, %v839
        %v842 = vsel %vm840, %v839, %v837
        %v843 = vlaneseq
        %v844 = vshrl.u32 %v843, 7
        %v845 = vsub.s32 7, %v844
        %v846 = vrot.slane %v564, %v845
        %v847 = vlaneseq
        %v848 = vshrl.u32 %v847, 7
        %v849 = vsub.s32 7, %v848
        %v850 = vrot.slane %v565, %v849
        %v851 = vmul.f32 %v846, %v841
        %v852 = vmul.f32 %v850, %v842
        %v853 = vadd.f32 %v828, %v851
        %v854 = vadd.f32 %v829, %v852
        %855 = vrot.lane.b32.xlu0 %v680, 111
        %v856 = vpop.permute.xlu0 %855
        %857 = vrot.lane.b32.xlu0 %v682, 111
        %v858 = vpop.permute.xlu0 %857
        %vm859 = vcmp.lt.s32.totalorder %v689, 111
        %v860 = vsel %vm859, %v856, %v858
        %v861 = vsel %vm859, %v858, %v856
        %v862 = vlaneseq
        %v863 = vshrl.u32 %v862, 7
        %v864 = vsub.s32 0, %v863
        %v865 = vrot.slane %v566, %v864
        %v866 = vlaneseq
        %v867 = vshrl.u32 %v866, 7
        %v868 = vsub.s32 0, %v867
        %v869 = vrot.slane %v567, %v868
        %v870 = vmul.f32 %v865, %v860
        %v871 = vmul.f32 %v869, %v861
        %v872 = vadd.f32 %v853, %v870
        %v873 = vadd.f32 %v854, %v871
        %v874 = vld [vmem:[%s6] sm:$0xf]
        %876 = vset.pattern.permute.xlu0 0
        %877 = vperm.xlu0 %876, %v874
        %v878 = vpop.permute.xlu0 %877
        %v880 = vadd.f32 %v872, %v878
        %v881 = vadd.f32 %v873, %v878
        %vm882 = vcmask 1043456
        %v883 = vsel %vm882, %v880, 0.0
        %v884 = vrot.slane %v883, 4
        %v885 = vadd.f32 %v883, %v884
        %v886 = vrot.slane %v885, 2
        %v887 = vadd.f32 %v885, %v886
        %v888 = vrot.slane %v887, 1
        %v889 = vadd.f32 %v887, %v888
        %v890 = vsel %vm882, %v881, 0.0
        %v891 = vrot.slane %v890, 4
        %v892 = vadd.f32 %v890, %v891
        %v893 = vrot.slane %v892, 2
        %v894 = vadd.f32 %v892, %v893
        %v895 = vrot.slane %v894, 1
        %v896 = vadd.f32 %v894, %v895
        %v897 = vrcp.pop 4.0
        %v898 = vmul.f32 %v889, %v897
        %v899 = vmul.f32 %v896, %v897
        %s900 = sld [smem:[#allocation10]]
        %901 = vrot.lane.b32.xlu0 %v898, 17
        %v902 = vpop.permute.xlu0 %901
        %903 = vrot.lane.b32.xlu0 %v899, 17
        %v904 = vpop.permute.xlu0 %903
        %v905 = vsel %vm690, %v902, %v904
        %v906 = vsel %vm690, %v904, %v902
        %v907 = vmul.f32 %v564, %v906
        %v908 = vmul.f32 %v565, %v905
        %v909 = vstv %s900
        %v910 = vmul.f32 %v909, %v907
        %v911 = vmul.f32 %v909, %v908
        %v912 = vadd.f32 %v910, 0.0
        %v913 = vadd.f32 %v911, 0.0
        %s914 = sld [smem:[#allocation10 + $0x1]]
        %915 = vrot.lane.b32.xlu0 %v898, 16
        %v916 = vpop.permute.xlu0 %915
        %917 = vrot.lane.b32.xlu0 %v899, 16
        %v918 = vpop.permute.xlu0 %917
        %v919 = vsel %vm715, %v916, %v918
        %v920 = vsel %vm715, %v918, %v916
        %v923 = vrot.slane %v920, 7
        %v924 = vrot.slane %v919, 7
        %v927 = vmul.f32 %v564, %v923
        %v928 = vmul.f32 %v565, %v924
        %v929 = vstv %s914
        %v930 = vmul.f32 %v929, %v927
        %v931 = vmul.f32 %v929, %v928
        %v934 = vrot.slane %v930, 1
        %v935 = vrot.slane %v931, 1
        %v938 = vadd.f32 %v912, %v934
        %v939 = vadd.f32 %v913, %v935
        %s940 = sld [smem:[#allocation10 + $0x2]]
        %941 = vrot.lane.b32.xlu0 %v898, 15
        %v942 = vpop.permute.xlu0 %941
        %943 = vrot.lane.b32.xlu0 %v899, 15
        %v944 = vpop.permute.xlu0 %943
        %v945 = vsel %vm734, %v942, %v944
        %v946 = vsel %vm734, %v944, %v942
        %v949 = vrot.slane %v946, 6
        %v950 = vrot.slane %v945, 6
        %v953 = vmul.f32 %v564, %v949
        %v954 = vmul.f32 %v565, %v950
        %v955 = vstv %s940
        %v956 = vmul.f32 %v955, %v953
        %v957 = vmul.f32 %v955, %v954
        %v960 = vrot.slane %v956, 2
        %v961 = vrot.slane %v957, 2
        %v964 = vadd.f32 %v938, %v960
        %v965 = vadd.f32 %v939, %v961
        %s966 = sld [smem:[#allocation10 + $0x3]]
        %967 = vrot.lane.b32.xlu0 %v898, 1
        %v968 = vpop.permute.xlu0 %967
        %969 = vrot.lane.b32.xlu0 %v899, 1
        %v970 = vpop.permute.xlu0 %969
        %v971 = vsel %vm759, %v968, %v970
        %v972 = vsel %vm759, %v970, %v968
        %v975 = vrot.slane %v972, 5
        %v976 = vrot.slane %v971, 5
        %v979 = vmul.f32 %v564, %v975
        %v980 = vmul.f32 %v565, %v976
        %v981 = vstv %s966
        %v982 = vmul.f32 %v981, %v979
        %v983 = vmul.f32 %v981, %v980
        %v986 = vrot.slane %v982, 3
        %v987 = vrot.slane %v983, 3
        %v990 = vadd.f32 %v964, %v986
        %v991 = vadd.f32 %v965, %v987
        %s992 = sld [smem:[#allocation10 + $0x4]]
        %v993 = vmul.f32 %v564, %v898
        %v994 = vmul.f32 %v565, %v899
        %v995 = vstv %s992
        %v996 = vmul.f32 %v995, %v993
        %v997 = vmul.f32 %v995, %v994
        %v1000 = vrot.slane %v996, 4
        %v1001 = vrot.slane %v997, 4
        %v1004 = vadd.f32 %v990, %v1000
        %v1005 = vadd.f32 %v991, %v1001
        %s1006 = sld [smem:[#allocation10 + $0x5]]
        %1007 = vrot.lane.b32.xlu0 %v898, 127
        %v1008 = vpop.permute.xlu0 %1007
        %1009 = vrot.lane.b32.xlu0 %v899, 127
        %v1010 = vpop.permute.xlu0 %1009
        %v1011 = vsel %vm796, %v1008, %v1010
        %v1012 = vsel %vm796, %v1010, %v1008
        %v1015 = vrot.slane %v1011, 3
        %v1016 = vrot.slane %v1012, 3
        %v1019 = vmul.f32 %v564, %v1015
        %v1020 = vmul.f32 %v565, %v1016
        %v1021 = vstv %s1006
        %v1022 = vmul.f32 %v1021, %v1019
        %v1023 = vmul.f32 %v1021, %v1020
        %v1026 = vrot.slane %v1022, 5
        %v1027 = vrot.slane %v1023, 5
        %v1030 = vadd.f32 %v1004, %v1026
        %v1031 = vadd.f32 %v1005, %v1027
        %s1032 = sld [smem:[#allocation10 + $0x6]]
        %1033 = vrot.lane.b32.xlu0 %v898, 113
        %v1034 = vpop.permute.xlu0 %1033
        %1035 = vrot.lane.b32.xlu0 %v899, 113
        %v1036 = vpop.permute.xlu0 %1035
        %v1037 = vsel %vm815, %v1034, %v1036
        %v1038 = vsel %vm815, %v1036, %v1034
        %v1041 = vrot.slane %v1037, 2
        %v1042 = vrot.slane %v1038, 2
        %v1045 = vmul.f32 %v564, %v1041
        %v1046 = vmul.f32 %v565, %v1042
        %v1047 = vstv %s1032
        %v1048 = vmul.f32 %v1047, %v1045
        %v1049 = vmul.f32 %v1047, %v1046
        %v1052 = vrot.slane %v1048, 6
        %v1053 = vrot.slane %v1049, 6
        %v1056 = vadd.f32 %v1030, %v1052
        %v1057 = vadd.f32 %v1031, %v1053
        %s1058 = sld [smem:[#allocation10 + $0x7]]
        %1059 = vrot.lane.b32.xlu0 %v898, 112
        %v1060 = vpop.permute.xlu0 %1059
        %1061 = vrot.lane.b32.xlu0 %v899, 112
        %v1062 = vpop.permute.xlu0 %1061
        %v1063 = vsel %vm840, %v1060, %v1062
        %v1064 = vsel %vm840, %v1062, %v1060
        %v1067 = vrot.slane %v1063, 1
        %v1068 = vrot.slane %v1064, 1
        %v1071 = vmul.f32 %v564, %v1067
        %v1072 = vmul.f32 %v565, %v1068
        %v1073 = vstv %s1058
        %v1074 = vmul.f32 %v1073, %v1071
        %v1075 = vmul.f32 %v1073, %v1072
        %v1078 = vrot.slane %v1074, 7
        %v1079 = vrot.slane %v1075, 7
        %v1082 = vadd.f32 %v1056, %v1078
        %v1083 = vadd.f32 %v1057, %v1079
        %s1084 = sld [smem:[#allocation10 + $0x8]]
        %1085 = vrot.lane.b32.xlu0 %v898, 111
        %v1086 = vpop.permute.xlu0 %1085
        %1087 = vrot.lane.b32.xlu0 %v899, 111
        %v1088 = vpop.permute.xlu0 %1087
        %v1089 = vsel %vm859, %v1086, %v1088
        %v1090 = vsel %vm859, %v1088, %v1086
        %v1091 = vmul.f32 %v566, %v1089
        %v1092 = vmul.f32 %v567, %v1090
        %v1093 = vstv %s1084
        %v1094 = vmul.f32 %v1093, %v1091
        %v1095 = vmul.f32 %v1093, %v1092
        %v1096 = vadd.f32 %v1082, %v1094
        %v1097 = vadd.f32 %v1083, %v1095
        %v1098 = vmax.f32 %v1096, 0.0
        %v1099 = vmax.f32 %v1097, 0.0
        %s1100 = sld [smem:[#allocation2]]
        %v1101 = vstv %s1100
        %v1102 = vmul.f32 %v1098, %v1101
        %v1103 = vmul.f32 %v1099, %v1101
        %v1104 = vxor.u32 %v1102, 2147483648
        %v1105 = vxor.u32 %v1103, 2147483648
        %v1106 = vmul.f32 %v1104, 1.442695
        %v1107 = vpow.pop %v1106
        %v1108 = vmul.f32 %v1105, 1.442695
        %v1109 = vpow.pop %v1108
        %v1110 = vadd.f32 %v1107, 1.0
        %v1111 = vadd.f32 %v1109, 1.0
        %v1112 = vrcp.pop %v1110
        %v1113 = vmul.f32 1.0, %v1112
        %v1114 = vrcp.pop %v1111
        %v1115 = vmul.f32 1.0, %v1114
        %v1116 = vld [vmem:[%s10] sm:$0xf]
        %v1117 = vld [vmem:[%s11] sm:$0xf]
        %1119 = vset.pattern.permute.xlu0 0
        %1120 = vperm.xlu0 %1119, %v1117
        %v1121 = vpop.permute.xlu0 %1120
        %v1123 = vlaneseq
        %v1124 = vshrl.u32 %v1123, 7
        %v1125 = vsub.s32 0, %v1124
        %v1126 = vrot.slane %v1113, %v1125
        %v1127 = vlaneseq
        %v1128 = vshrl.u32 %v1127, 7
        %v1129 = vsub.s32 0, %v1128
        %v1130 = vrot.slane %v1115, %v1129
        %v1131 = vmul.f32 %v1121, %v1126
        %v1132 = vmul.f32 %v1121, %v1130
        %vm1133 = vcmask 31744
        %v1135 = vsel %vm1133, %v1116, 0
        %v1138 = vsel %vm882, %v880, 0
        %v1141 = vsel %vm882, %v881, 0
        %1143 = vmatprep.subr.mxu0 0.0
        %1144 = vmatpush1.msra.mxu0 0.0
        %1145 = vmatprep.subr.mxu0 0.0
        %1146 = vmatpush1.msra.mxu0 0.0
        %1147 = vmatprep.subr.mxu0 0.0
        %1148 = vmatpush1.msra.mxu0 0.0
        %1149 = vmatprep.subr.mxu0 0.0
        %1150 = vmatpush1.msra.mxu0 0.0
        %1151 = vmatprep.subr.mxu0 0.0
        %1152 = vmatpush1.msra.mxu0 0.0
        %1153 = vmatprep.subr.mxu0 0.0
        %1154 = vmatpush1.msra.mxu0 0.0
        %1155 = vmatprep.subr.mxu0 0.0
        %1156 = vmatpush1.msra.mxu0 0.0
        %1157 = vmatprep.subr.mxu0 0.0
        %1158 = vmatpush1.msra.mxu0 0.0
        %1159 = vmatprep.subr.mxu0 0.0
        %1160 = vmatpush1.msra.mxu0 0.0
        %1161 = vmatprep.subr.mxu0 0.0
        %1162 = vmatpush1.msra.mxu0 0.0
        %1163 = vmatprep.subr.mxu0 0.0
        %1164 = vmatpush1.msra.mxu0 0.0
        %1165 = vmatprep.subr.mxu0 0.0
        %1166 = vmatpush1.msra.mxu0 0.0
        %1167 = vmatprep.subr.mxu0 0.0
        %1168 = vmatpush1.msra.mxu0 0.0
        %1169 = vmatprep.subr.mxu0 0.0
        %1170 = vmatpush1.msra.mxu0 0.0
        %1171 = vmatprep.subr.mxu0 0.0
        %1172 = vmatpush1.msra.mxu0 0.0
        %1173 = vmatprep.subr.mxu0 %v1141
        %1174 = vmatpush1.msra.mxu0 %v1138
        %1175 = vmatprep.subr.mxu0 0.0
        %1176 = vmatpush2.msra.mxu0 0.0
        %1177 = vmatprep.subr.mxu0 0.0
        %1178 = vmatpush2.msra.mxu0 0.0
        %1179 = vmatprep.subr.mxu0 0.0
        %1180 = vmatpush2.msra.mxu0 0.0
        %1181 = vmatprep.subr.mxu0 0.0
        %1182 = vmatpush2.msra.mxu0 0.0
        %1183 = vmatprep.subr.mxu0 0.0
        %1184 = vmatpush2.msra.mxu0 0.0
        %1185 = vmatprep.subr.mxu0 0.0
        %1186 = vmatpush2.msra.mxu0 0.0
        %1187 = vmatprep.subr.mxu0 0.0
        %1188 = vmatpush2.msra.mxu0 0.0
        %1189 = vmatprep.subr.mxu0 0.0
        %1190 = vmatpush2.msra.mxu0 0.0
        %1191 = vmatprep.subr.mxu0 0.0
        %1192 = vmatpush2.msra.mxu0 0.0
        %1193 = vmatprep.subr.mxu0 0.0
        %1194 = vmatpush2.msra.mxu0 0.0
        %1195 = vmatprep.subr.mxu0 0.0
        %1196 = vmatpush2.msra.mxu0 0.0
        %1197 = vmatprep.subr.mxu0 0.0
        %1198 = vmatpush2.msra.mxu0 0.0
        %1199 = vmatprep.subr.mxu0 0.0
        %1200 = vmatpush2.msra.mxu0 0.0
        %1201 = vmatprep.subr.mxu0 0.0
        %1202 = vmatpush2.msra.mxu0 0.0
        %1203 = vmatprep.subr.mxu0 0.0
        %1204 = vmatpush2.msra.mxu0 0.0
        %1205 = vmatprep.subr.mxu0 0.0
        %1206 = vmatpush2.msra.mxu0 0.0
        %1207 = vmatprep.mubr.f32.mxu0 0.0
        %1208 = vmatmul.mubr.f32.gmra.mxu0 %v1135
        %v1209 = vpop.f32.mrf.mxu0
        %v1210 = vadd.f32 %v1131, %v1209
        %v1211 = vpop.f32.mrf.mxu0
        %v1212 = vadd.f32 %v1132, %v1211
        %1213 = vdwg.mxu0
        %v1214 = vxor.u32 %v1210, 2147483648
        %v1215 = vxor.u32 %v1212, 2147483648
        %v1216 = vmul.f32 %v1214, 1.442695
        %v1217 = vpow.pop %v1216
        %v1218 = vmul.f32 %v1215, 1.442695
        %v1219 = vpow.pop %v1218
        %v1220 = vadd.f32 %v1217, 1.0
        %v1221 = vadd.f32 %v1219, 1.0
        %v1222 = vrcp.pop %v1220
        %v1223 = vmul.f32 1.0, %v1222
        %v1224 = vrcp.pop %v1221
        %v1225 = vmul.f32 1.0, %v1224
        %v1226 = vld [vmem:[%s464] sm:$0xf]
        %v1227 = vunpack.c.l.bf16 %v1226
        %v1228 = vlaneseq
        %v1229 = vshrl.u32 %v1228, 7
        %v1230 = vsub.s32 0, %v1229
        %v1231 = vrot.slane %v1223, %v1230
        %v1232 = vlaneseq
        %v1233 = vshrl.u32 %v1232, 7
        %v1234 = vsub.s32 0, %v1233
        %v1235 = vrot.slane %v1225, %v1234
        %v1237 = vcombine.high %v1227, %v1227
        %v1239 = vmul.f32 %v1231, %v1227
        %v1240 = vmul.f32 %v1235, %v1237
        %v1241 = vld [vmem:[%s473] sm:$0xf]
        %v1242 = vunpack.c.l.bf16 %v1241
        %v1243 = vlaneseq
        %v1244 = vshrl.u32 %v1243, 7
        %v1245 = vsub.s32 1, %v1244
        %v1246 = vrot.slane %v1223, %v1245
        %v1247 = vlaneseq
        %v1248 = vshrl.u32 %v1247, 7
        %v1249 = vsub.s32 1, %v1248
        %v1250 = vrot.slane %v1225, %v1249
        %v1252 = vcombine.high %v1242, %v1242
        %v1254 = vmul.f32 %v1246, %v1242
        %v1255 = vmul.f32 %v1250, %v1252
        %v1256 = vld [vmem:[%s557] sm:$0xf]
        %v1257 = vunpack.c.l.bf16 %v1256
        %v1258 = vlaneseq
        %v1259 = vshrl.u32 %v1258, 7
        %v1260 = vsub.s32 2, %v1259
        %v1261 = vrot.slane %v1223, %v1260
        %v1262 = vlaneseq
        %v1263 = vshrl.u32 %v1262, 7
        %v1264 = vsub.s32 2, %v1263
        %v1265 = vrot.slane %v1225, %v1264
        %v1267 = vcombine.high %v1257, %v1257
        %v1269 = vmul.f32 %v1261, %v1257
        %v1270 = vmul.f32 %v1265, %v1267
        %v1271 = vld [vmem:[%s482] sm:$0xf]
        %v1272 = vunpack.c.l.bf16 %v1271
        %v1273 = vlaneseq
        %v1274 = vshrl.u32 %v1273, 7
        %v1275 = vsub.s32 3, %v1274
        %v1276 = vrot.slane %v1223, %v1275
        %v1277 = vlaneseq
        %v1278 = vshrl.u32 %v1277, 7
        %v1279 = vsub.s32 3, %v1278
        %v1280 = vrot.slane %v1225, %v1279
        %v1282 = vcombine.high %v1272, %v1272
        %v1284 = vmul.f32 %v1276, %v1272
        %v1285 = vmul.f32 %v1280, %v1282
        %v1288 = vrot.slane %v1254, 4
        %v1289 = vrot.slane %v1255, 4
        %v1294 = vrot.slane %v1284, 4
        %v1295 = vrot.slane %v1285, 4
        %v1298 = vsel %vm882, %v1239, %v1288
        %v1299 = vsel %vm882, %v1240, %v1289
        %v1300 = vsel %vm882, %v1269, %v1294
        %v1301 = vsel %vm882, %v1270, %v1295
        %v1302 = vpack.c.bf16 %v1300, %v1298
        %v1303 = vpack.c.bf16 %v1301, %v1299
        %v1306 = vunpack.c.l.b16 %v1302
        %v1307 = vunpack.c.l.b16 %v1303
        %v1308 = vunpack.c.h.b16 %v1302
        %v1309 = vunpack.c.h.b16 %v1303
        %v1310 = vpack.c.b16 %v1307, %v1306
        %v1311 = vpack.c.b16 %v1309, %v1308
        %1314 = vst [vmem:[%s547] sm:$0xff] %v1310
        %1315 = vst [vmem:[%s547 + $0x8] sm:$0xff] %v1311
        %s1316 = sand.u32 %s319, 1
        %s1317 = scalar_lea.sflag [#allocation5], %s1316
        %s1318 = sand.u32 %s319, 1
        %s1319 = smul.addr %s1318, 16
        %s1320 = scalar_lea.vmem [#allocation11], %s1319
        // Predicated region
        $region85: #{tpu_custom_call.1} parent=67 // pred_check
          %p1321 = pneg %p329
        $region86: #{tpu_custom_call.1} parent=67 // pred_check_branch
          %1323 = sbr.rel (%p1321) target = $region88
        $region87: #{tpu_custom_call.1} parent=67 // pred_region
          %s1325 = ssub.s32 256, 256
          %1326 = vsyncadd %s1317, %s1325
          %s1327 = smul.addr %s34, 4
          %s1328 = smul.addr %s1327, 64
          %s1329 = scalar_lea.hbm %s12, %s1328
          %s1330 = sshll.u32 %s1320, 4
          %s1331 = int_to_ptr.vmem [resolvable:$true] %s1330
          %1336 = dma.vmem_to_hbm [thread:$0]  %s1331, 256, %s1329, %s1317, 128, 128, 8
        $region88: #{tpu_custom_call.1} parent=67 // pred_fallthru
          _
      $region68: #{tpu_custom_call.1} parent=5 // pred_fallthru
        _
      %p1337 = scmp.le.s32.totalorder 2, %s29
      // Predicated region
      $region89: #{tpu_custom_call.1} parent=5 // pred_check
        %p1338 = pneg %p1337
      $region90: #{tpu_custom_call.1} parent=5 // pred_check_branch
        %1340 = sbr.rel (%p1338) target = $region92
      $region91: #{tpu_custom_call.1} parent=5 // pred_region
        %s1341 = ssub.s32 %s29, 2
        // Predicated region
        $region93: #{tpu_custom_call.1} parent=91 // pred_check
          %p1342 = pneg %p335
        $region94: #{tpu_custom_call.1} parent=91 // pred_check_branch
          %1344 = sbr.rel (%p1342) target = $region96
        $region95: #{tpu_custom_call.1} parent=91 // pred_region
          %s1345 = sand.u32 %s320, 1
          %s1346 = scalar_lea.sflag [#allocation5], %s1345
          %s1347 = sand.u32 %s320, 1
          %s1348 = smul.addr %s1347, 16
          %s1349 = scalar_lea.vmem [#allocation11], %s1348
          %1350 = dma.done %s1346, 256
        $region96: #{tpu_custom_call.1} parent=91 // pred_fallthru
          _
      $region92: #{tpu_custom_call.1} parent=5 // pred_fallthru
        _
    $region6: #{tpu_custom_call.1} parent=1 // loop_footer
      %s33 = sadd.s32 1, %s29
    $region7: #{tpu_custom_call.1} parent=1 // loop_footer_branch
      %28 = sbr.rel target = $region3
    $region8: #{tpu_custom_call.1} parent=1 // loop_exit
      _
    %1351 = vsyncpa [#allocation4], 1
    %s1352 = scalar_lea.sflag [#allocation4], 1
    %1353 = vsyncpa %s1352, 1
    %1354 = vsyncpa [#allocation8], 1
    %s1355 = scalar_lea.sflag [#allocation8], 1
    %1356 = vsyncpa %s1355, 1
    %1357 = vsyncpa [#allocation5], 1
    %s1358 = scalar_lea.sflag [#allocation5], 1
    %1359 = vsyncpa %s1358, 1
    %1360 = vsyncpa [#allocation6], 1
    %s1361 = scalar_lea.sflag [#allocation6], 1
    %1362 = vsyncpa %s1361, 1

</llo_original>
